<compile_context>
chip_gen: v6e
topology: v6e:2x2x1
jax: 0.10.0
libtpu: 0.0.40
codegen_flags: <defaults>
</compile_context>

<pallas_src>
import functools

import jax
import jax.numpy as jnp
import numpy as np
from jax.experimental import pallas as pl
from jax.experimental.pallas import tpu as pltpu


def _warp_kernel(base_ref, img_ref, flow_ref, out_ref, *, H, W, B_TILE):
    """One (batch-tile, row-tile) block per grid step.

    base_ref: (2, P)             identity grid for this row tile (row 0 = x, row 1 = y)
    img_ref : (B_TILE, 1, H, W)  full moving images for this batch tile
    flow_ref: (B_TILE, 2, P)     displacement field (ch0 = dx, ch1 = dy), flattened
    out_ref : (B_TILE, 1, P)     warped output, flattened row tile
    """
    P = out_ref.shape[-1]

    gx = base_ref[0:1, :]                                    # (1, P) absolute x
    gy = base_ref[1:2, :]                                    # (1, P) absolute y

    # One-hot comparison iotas, built once and reused across the batch loop.
    iota_w = jax.lax.broadcasted_iota(jnp.int32, (W, P), 0)
    iota_h = jax.lax.broadcasted_iota(jnp.int32, (H, P), 0)

    def body(b, carry):
        fl = flow_ref[b].astype(jnp.float32)                 # (2, P)
        x = jnp.clip(gx + fl[0:1, :], 0.0, float(W - 1))     # (1, P)
        y = jnp.clip(gy + fl[1:2, :], 0.0, float(H - 1))

        x0 = jnp.floor(x)
        y0 = jnp.floor(y)
        wx1 = x - x0
        wx0 = 1.0 - wx1
        wy1 = y - y0
        wy0 = 1.0 - wy1
        x0i = x0.astype(jnp.int32)
        y0i = y0.astype(jnp.int32)
        x1i = jnp.minimum(x0i + 1, W - 1)   # weight is 0 whenever this clamps
        y1i = jnp.minimum(y0i + 1, H - 1)

        # Separable bilinear weights as lane-dense "transposed one-hots".
        WxT = (jnp.where(iota_w == x0i, wx0, 0.0)
               + jnp.where(iota_w == x1i, wx1, 0.0))          # (W, P)
        WyT = (jnp.where(iota_h == y0i, wy0, 0.0)
               + jnp.where(iota_h == y1i, wy1, 0.0))          # (H, P)

        img = img_ref[b, 0].astype(jnp.float32)               # (H, W)
        # Column gather + x-blend on the MXU: (H, W) @ (W, P) -> (H, P).
        m = jnp.dot(img, WxT, preferred_element_type=jnp.float32,
                    precision=jax.lax.Precision.HIGHEST)
        # Row (y) blend: elementwise mul + sublane reduce over H.
        warped = jnp.sum(WyT * m, axis=0, keepdims=True)       # (1, P)
        out_ref[b] = warped.astype(out_ref.dtype)
        return carry

    jax.lax.fori_loop(0, B_TILE, body, 0, unroll=True)


def _pick_row_tile(H, W):
    """Rows of output per grid step so the working set stays well under VMEM.

    Per step the kernel materializes ~P*(W + 2*H) f32 temps (P = TH*W); target
    ~12 MiB so it fits v7x's 64 MiB physical VMEM (and v5e's 16 MiB default
    scoped limit) with double-buffering headroom.
    """
    budget = 12 * 1024 * 1024
    per_row = W * (W + 2 * H + 8) * 4
    th = max(1, min(H, budget // max(per_row, 1)))
    if th >= H:
        return H
    # Need H % TH == 0 and a lane-dense (multiple of 128) flattened tile.
    while th > 1 and (H % th != 0 or (th * W) % 128 != 0):
        th -= 1
    if H % th != 0 or (th * W) % 128 != 0:
        return H  # TODO(synk): awkward H/W combination; full-H fallback
    return th


def spatial_transformer_2d(input_image, flow, *, batch_tile=None, row_tile=None):
    """input_image: (N, 1, H, W); flow: (N, 2, H, W) with ch0 = dx, ch1 = dy."""
    N, C, H, W = input_image.shape
    assert C == 1 and flow.shape == (N, 2, H, W)
    HW = H * W

    if batch_tile is None:
        batch_tile = min(N, 8)             # amortize per-grid-step overhead
    n_pad = (-N) % batch_tile
    if n_pad:
        input_image = jnp.pad(input_image, ((0, n_pad), (0, 0), (0, 0), (0, 0)))
        flow = jnp.pad(flow, ((0, n_pad), (0, 0), (0, 0), (0, 0)))
    Np = N + n_pad

    if row_tile is None:
        row_tile = _pick_row_tile(H, W)
    TH = row_tile
    P = TH * W

    # Identity sampling grid, (2, H*W): row 0 = x (width), row 1 = y (height).
    gx = jnp.tile(jnp.arange(W, dtype=jnp.float32), H)
    gy = jnp.repeat(jnp.arange(H, dtype=jnp.float32), W)
    base = jnp.stack([gx, gy], axis=0)                        # (2, HW)

    flow_flat = flow.reshape(Np, 2, HW)                       # lane-dense flow

    kernel = functools.partial(_warp_kernel, H=H, W=W, B_TILE=batch_tile)
    out_flat = pl.pallas_call(
        kernel,
        out_shape=jax.ShapeDtypeStruct((Np, 1, HW), input_image.dtype),
        grid_spec=pltpu.PrefetchScalarGridSpec(
            num_scalar_prefetch=0,
            grid=(Np // batch_tile, H // TH),
            in_specs=[
                pl.BlockSpec((2, P), lambda bi, ri: (0, ri)),
                pl.BlockSpec((batch_tile, 1, H, W), lambda bi, ri: (bi, 0, 0, 0)),
                pl.BlockSpec((batch_tile, 2, P), lambda bi, ri: (bi, 0, ri)),
            ],
            out_specs=pl.BlockSpec((batch_tile, 1, P), lambda bi, ri: (bi, 0, ri)),
        ),
        compiler_params=pltpu.CompilerParams(
            dimension_semantics=("parallel", "parallel"),
            vmem_limit_bytes=48 * 1024 * 1024),
    )(base, input_image, flow_flat)

    return out_flat[:N].reshape(N, 1, H, W)


def _reference(input_image, flow):
    """Pure-JAX reference with identical grid_sample(border, align_corners) math."""
    N, _, H, W = input_image.shape
    gy, gx = jnp.meshgrid(jnp.arange(H, dtype=jnp.float32),
                          jnp.arange(W, dtype=jnp.float32), indexing="ij")
    x = jnp.clip(gx[None] + flow[:, 0], 0.0, W - 1.0)
    y = jnp.clip(gy[None] + flow[:, 1], 0.0, H - 1.0)
    x0 = jnp.floor(x); y0 = jnp.floor(y)
    wx1 = x - x0; wx0 = 1.0 - wx1
    wy1 = y - y0; wy0 = 1.0 - wy1
    x0i = x0.astype(jnp.int32); y0i = y0.astype(jnp.int32)
    x1i = jnp.minimum(x0i + 1, W - 1); y1i = jnp.minimum(y0i + 1, H - 1)
    img = input_image[:, 0].reshape(N, H * W)

    def gather(yi, xi):
        idx = (yi * W + xi).reshape(N, H * W)
        return jnp.take_along_axis(img, idx, axis=1).reshape(N, H, W)

    out = (wy0 * wx0 * gather(y0i, x0i) + wy0 * wx1 * gather(y0i, x1i)
           + wy1 * wx0 * gather(y1i, x0i) + wy1 * wx1 * gather(y1i, x1i))
    return out[:, None]


if __name__ == "__main__":
    key = jax.random.PRNGKey(0)
    k_img, k_flow = jax.random.split(key)
    N, H, W = 2, 16, 16

    input_image = jax.random.uniform(k_img, (N, 1, H, W), dtype=jnp.float32)
    flow = 3.0 * jax.random.normal(k_flow, (N, 2, H, W), dtype=jnp.float32)

    warped = jax.block_until_ready(spatial_transformer_2d(input_image, flow))

    ref = jax.block_until_ready(_reference(input_image, flow))
    np.testing.assert_allclose(np.asarray(warped), np.asarray(ref),
                               rtol=1e-5, atol=1e-5)
    print("KERNEL_OK")
</pallas_src>

<mosaic_0001>
module attributes {stable_mosaic.version = 11 : i64} {
  func.func @_warp_kernel(%arg0: i32, %arg1: i32, %arg2: memref<2x256xf32, #tpu.memory_space<vmem>>, %arg3: memref<2x1x16x16xf32, #tpu.memory_space<vmem>>, %arg4: memref<2x2x256xf32, #tpu.memory_space<vmem>>, %arg5: memref<2x1x256xf32, #tpu.memory_space<vmem>>) attributes {dimension_semantics = [#tpu.dimension_semantics<parallel>, #tpu.dimension_semantics<parallel>], iteration_bounds = array<i64: 1, 1>, scalar_prefetch = 0 : i64, scratch_operands = 0 : i64, tpu.core_type = #tpu.core_type<tc>, window_params = [{transform_indices = @transform_0, window_bounds = array<i64: 2, 256>}, {transform_indices = @transform_1, window_bounds = array<i64: 2, 1, 16, 16>}, {transform_indices = @transform_2, window_bounds = array<i64: 2, 2, 256>}, {transform_indices = @transform_3, window_bounds = array<i64: 2, 1, 256>}]} {
    %c0 = arith.constant 0 : index
    %c0_0 = arith.constant 0 : index
    %0 = vector.load %arg2[%c0, %c0_0] : memref<2x256xf32, #tpu.memory_space<vmem>>, vector<1x256xf32>
    %c1 = arith.constant 1 : index
    %c0_1 = arith.constant 0 : index
    %1 = vector.load %arg2[%c1, %c0_1] : memref<2x256xf32, #tpu.memory_space<vmem>>, vector<1x256xf32>
    %2 = tpu.iota {dimensions = array<i32: 0>} : vector<16x256xi32>
    %3 = tpu.iota {dimensions = array<i32: 0>} : vector<16x256xi32>
    %c0_i32 = arith.constant 0 : i32
    %4 = arith.index_cast %c0_i32 : i32 to index
    %c0_2 = arith.constant 0 : index
    %c0_3 = arith.constant 0 : index
    %5 = vector.load %arg4[%4, %c0_2, %c0_3] : memref<2x2x256xf32, #tpu.memory_space<vmem>>, vector<1x2x256xf32>
    %6 = vector.shape_cast %5 : vector<1x2x256xf32> to vector<2x256xf32>
    %7 = vector.extract_strided_slice %6 {offsets = [0, 0], sizes = [1, 256], strides = [1, 1]} : vector<2x256xf32> to vector<1x256xf32>
    %8 = arith.addf %0, %7 : vector<1x256xf32>
    %cst = arith.constant 0.000000e+00 : f32
    %cst_4 = arith.constant 1.500000e+01 : f32
    %9 = vector.broadcast %cst : f32 to vector<1x256xf32>
    %10 = arith.maximumf %9, %8 : vector<1x256xf32>
    %11 = vector.broadcast %cst_4 : f32 to vector<1x256xf32>
    %12 = arith.minimumf %11, %10 : vector<1x256xf32>
    %13 = vector.extract_strided_slice %6 {offsets = [1, 0], sizes = [1, 256], strides = [1, 1]} : vector<2x256xf32> to vector<1x256xf32>
    %14 = arith.addf %1, %13 : vector<1x256xf32>
    %cst_5 = arith.constant 0.000000e+00 : f32
    %cst_6 = arith.constant 1.500000e+01 : f32
    %15 = vector.broadcast %cst_5 : f32 to vector<1x256xf32>
    %16 = arith.maximumf %15, %14 : vector<1x256xf32>
    %17 = vector.broadcast %cst_6 : f32 to vector<1x256xf32>
    %18 = arith.minimumf %17, %16 : vector<1x256xf32>
    %19 = math.floor %12 : vector<1x256xf32>
    %20 = math.floor %18 : vector<1x256xf32>
    %21 = arith.subf %12, %19 : vector<1x256xf32>
    %cst_7 = arith.constant 1.000000e+00 : f32
    %22 = vector.broadcast %cst_7 : f32 to vector<1x256xf32>
    %23 = arith.subf %22, %21 : vector<1x256xf32>
    %24 = arith.subf %18, %20 : vector<1x256xf32>
    %cst_8 = arith.constant 1.000000e+00 : f32
    %25 = vector.broadcast %cst_8 : f32 to vector<1x256xf32>
    %26 = arith.subf %25, %24 : vector<1x256xf32>
    %27 = arith.fptosi %19 : vector<1x256xf32> to vector<1x256xi32>
    %28 = arith.fptosi %20 : vector<1x256xf32> to vector<1x256xi32>
    %c1_i32 = arith.constant 1 : i32
    %29 = vector.broadcast %c1_i32 : i32 to vector<1x256xi32>
    %30 = arith.addi %27, %29 : vector<1x256xi32>
    %c15_i32 = arith.constant 15 : i32
    %31 = vector.broadcast %c15_i32 : i32 to vector<1x256xi32>
    %32 = arith.minsi %30, %31 : vector<1x256xi32>
    %c1_i32_9 = arith.constant 1 : i32
    %33 = vector.broadcast %c1_i32_9 : i32 to vector<1x256xi32>
    %34 = arith.addi %28, %33 : vector<1x256xi32>
    %c15_i32_10 = arith.constant 15 : i32
    %35 = vector.broadcast %c15_i32_10 : i32 to vector<1x256xi32>
    %36 = arith.minsi %34, %35 : vector<1x256xi32>
    %37 = vector.broadcast %27 : vector<1x256xi32> to vector<16x256xi32>
    %38 = arith.cmpi eq, %2, %37 : vector<16x256xi32>
    %cst_11 = arith.constant 0.000000e+00 : f32
    %39 = vector.shape_cast %23 : vector<1x256xf32> to vector<1x256xf32>
    %40 = vector.broadcast %39 : vector<1x256xf32> to vector<16x256xf32>
    %41 = vector.broadcast %cst_11 : f32 to vector<16x256xf32>
    %42 = arith.select %38, %40, %41 : vector<16x256xi1>, vector<16x256xf32>
    %43 = vector.broadcast %32 : vector<1x256xi32> to vector<16x256xi32>
    %44 = arith.cmpi eq, %2, %43 : vector<16x256xi32>
    %cst_12 = arith.constant 0.000000e+00 : f32
    %45 = vector.shape_cast %21 : vector<1x256xf32> to vector<1x256xf32>
    %46 = vector.broadcast %45 : vector<1x256xf32> to vector<16x256xf32>
    %47 = vector.broadcast %cst_12 : f32 to vector<16x256xf32>
    %48 = arith.select %44, %46, %47 : vector<16x256xi1>, vector<16x256xf32>
    %49 = arith.addf %42, %48 : vector<16x256xf32>
    %50 = vector.broadcast %28 : vector<1x256xi32> to vector<16x256xi32>
    %51 = arith.cmpi eq, %3, %50 : vector<16x256xi32>
    %cst_13 = arith.constant 0.000000e+00 : f32
    %52 = vector.shape_cast %26 : vector<1x256xf32> to vector<1x256xf32>
    %53 = vector.broadcast %52 : vector<1x256xf32> to vector<16x256xf32>
    %54 = vector.broadcast %cst_13 : f32 to vector<16x256xf32>
    %55 = arith.select %51, %53, %54 : vector<16x256xi1>, vector<16x256xf32>
    %56 = vector.broadcast %36 : vector<1x256xi32> to vector<16x256xi32>
    %57 = arith.cmpi eq, %3, %56 : vector<16x256xi32>
    %cst_14 = arith.constant 0.000000e+00 : f32
    %58 = vector.shape_cast %24 : vector<1x256xf32> to vector<1x256xf32>
    %59 = vector.broadcast %58 : vector<1x256xf32> to vector<16x256xf32>
    %60 = vector.broadcast %cst_14 : f32 to vector<16x256xf32>
    %61 = arith.select %57, %59, %60 : vector<16x256xi1>, vector<16x256xf32>
    %62 = arith.addf %55, %61 : vector<16x256xf32>
    %63 = arith.index_cast %c0_i32 : i32 to index
    %c0_15 = arith.constant 0 : index
    %c0_16 = arith.constant 0 : index
    %c0_17 = arith.constant 0 : index
    %64 = vector.load %arg3[%63, %c0_15, %c0_16, %c0_17] : memref<2x1x16x16xf32, #tpu.memory_space<vmem>>, vector<1x1x16x16xf32>
    %65 = vector.shape_cast %64 : vector<1x1x16x16xf32> to vector<16x16xf32>
    %cst_18 = arith.constant dense<0.000000e+00> : vector<16x256xf32>
    %66 = tpu.matmul %65, %49, %cst_18 {dimension_numbers = #tpu.dot_dimension_numbers<[1], [0], [0], [1], [0, 0, 1, 1], [], []>, precision = #tpu.contract_precision<fp32>} : vector<16x16xf32>, vector<16x256xf32>, vector<16x256xf32> -> vector<16x256xf32>
    %67 = arith.mulf %62, %66 : vector<16x256xf32>
    %cst_19 = arith.constant dense<0.000000e+00> : vector<256xf32>
    %68 = vector.multi_reduction <add>, %67, %cst_19 [0] : vector<16x256xf32> to vector<256xf32>
    %69 = vector.shape_cast %68 : vector<256xf32> to vector<1x256xf32>
    %70 = arith.index_cast %c0_i32 : i32 to index
    %c0_20 = arith.constant 0 : index
    %c0_21 = arith.constant 0 : index
    %71 = vector.load %arg5[%70, %c0_20, %c0_21] : memref<2x1x256xf32, #tpu.memory_space<vmem>>, vector<1x1x256xf32>
    %72 = vector.shape_cast %71 : vector<1x1x256xf32> to vector<1x256xf32>
    %73 = vector.shape_cast %69 : vector<1x256xf32> to vector<1x1x256xf32>
    tpu.vector_store %arg5[%70, %c0_20, %c0_21], %73 {strides = array<i32>} : memref<2x1x256xf32, #tpu.memory_space<vmem>>, vector<1x1x256xf32>,
    %c1_i32_22 = arith.constant 1 : i32
    %74 = arith.index_cast %c1_i32_22 : i32 to index
    %c0_23 = arith.constant 0 : index
    %c0_24 = arith.constant 0 : index
    %75 = vector.load %arg4[%74, %c0_23, %c0_24] : memref<2x2x256xf32, #tpu.memory_space<vmem>>, vector<1x2x256xf32>
    %76 = vector.shape_cast %75 : vector<1x2x256xf32> to vector<2x256xf32>
    %77 = vector.extract_strided_slice %76 {offsets = [0, 0], sizes = [1, 256], strides = [1, 1]} : vector<2x256xf32> to vector<1x256xf32>
    %78 = arith.addf %0, %77 : vector<1x256xf32>
    %cst_25 = arith.constant 0.000000e+00 : f32
    %cst_26 = arith.constant 1.500000e+01 : f32
    %79 = vector.broadcast %cst_25 : f32 to vector<1x256xf32>
    %80 = arith.maximumf %79, %78 : vector<1x256xf32>
    %81 = vector.broadcast %cst_26 : f32 to vector<1x256xf32>
    %82 = arith.minimumf %81, %80 : vector<1x256xf32>
    %83 = vector.extract_strided_slice %76 {offsets = [1, 0], sizes = [1, 256], strides = [1, 1]} : vector<2x256xf32> to vector<1x256xf32>
    %84 = arith.addf %1, %83 : vector<1x256xf32>
    %cst_27 = arith.constant 0.000000e+00 : f32
    %cst_28 = arith.constant 1.500000e+01 : f32
    %85 = vector.broadcast %cst_27 : f32 to vector<1x256xf32>
    %86 = arith.maximumf %85, %84 : vector<1x256xf32>
    %87 = vector.broadcast %cst_28 : f32 to vector<1x256xf32>
    %88 = arith.minimumf %87, %86 : vector<1x256xf32>
    %89 = math.floor %82 : vector<1x256xf32>
    %90 = math.floor %88 : vector<1x256xf32>
    %91 = arith.subf %82, %89 : vector<1x256xf32>
    %cst_29 = arith.constant 1.000000e+00 : f32
    %92 = vector.broadcast %cst_29 : f32 to vector<1x256xf32>
    %93 = arith.subf %92, %91 : vector<1x256xf32>
    %94 = arith.subf %88, %90 : vector<1x256xf32>
    %cst_30 = arith.constant 1.000000e+00 : f32
    %95 = vector.broadcast %cst_30 : f32 to vector<1x256xf32>
    %96 = arith.subf %95, %94 : vector<1x256xf32>
    %97 = arith.fptosi %89 : vector<1x256xf32> to vector<1x256xi32>
    %98 = arith.fptosi %90 : vector<1x256xf32> to vector<1x256xi32>
    %c1_i32_31 = arith.constant 1 : i32
    %99 = vector.broadcast %c1_i32_31 : i32 to vector<1x256xi32>
    %100 = arith.addi %97, %99 : vector<1x256xi32>
    %c15_i32_32 = arith.constant 15 : i32
    %101 = vector.broadcast %c15_i32_32 : i32 to vector<1x256xi32>
    %102 = arith.minsi %100, %101 : vector<1x256xi32>
    %c1_i32_33 = arith.constant 1 : i32
    %103 = vector.broadcast %c1_i32_33 : i32 to vector<1x256xi32>
    %104 = arith.addi %98, %103 : vector<1x256xi32>
    %c15_i32_34 = arith.constant 15 : i32
    %105 = vector.broadcast %c15_i32_34 : i32 to vector<1x256xi32>
    %106 = arith.minsi %104, %105 : vector<1x256xi32>
    %107 = vector.broadcast %97 : vector<1x256xi32> to vector<16x256xi32>
    %108 = arith.cmpi eq, %2, %107 : vector<16x256xi32>
    %cst_35 = arith.constant 0.000000e+00 : f32
    %109 = vector.shape_cast %93 : vector<1x256xf32> to vector<1x256xf32>
    %110 = vector.broadcast %109 : vector<1x256xf32> to vector<16x256xf32>
    %111 = vector.broadcast %cst_35 : f32 to vector<16x256xf32>
    %112 = arith.select %108, %110, %111 : vector<16x256xi1>, vector<16x256xf32>
    %113 = vector.broadcast %102 : vector<1x256xi32> to vector<16x256xi32>
    %114 = arith.cmpi eq, %2, %113 : vector<16x256xi32>
    %cst_36 = arith.constant 0.000000e+00 : f32
    %115 = vector.shape_cast %91 : vector<1x256xf32> to vector<1x256xf32>
    %116 = vector.broadcast %115 : vector<1x256xf32> to vector<16x256xf32>
    %117 = vector.broadcast %cst_36 : f32 to vector<16x256xf32>
    %118 = arith.select %114, %116, %117 : vector<16x256xi1>, vector<16x256xf32>
    %119 = arith.addf %112, %118 : vector<16x256xf32>
    %120 = vector.broadcast %98 : vector<1x256xi32> to vector<16x256xi32>
    %121 = arith.cmpi eq, %3, %120 : vector<16x256xi32>
    %cst_37 = arith.constant 0.000000e+00 : f32
    %122 = vector.shape_cast %96 : vector<1x256xf32> to vector<1x256xf32>
    %123 = vector.broadcast %122 : vector<1x256xf32> to vector<16x256xf32>
    %124 = vector.broadcast %cst_37 : f32 to vector<16x256xf32>
    %125 = arith.select %121, %123, %124 : vector<16x256xi1>, vector<16x256xf32>
    %126 = vector.broadcast %106 : vector<1x256xi32> to vector<16x256xi32>
    %127 = arith.cmpi eq, %3, %126 : vector<16x256xi32>
    %cst_38 = arith.constant 0.000000e+00 : f32
    %128 = vector.shape_cast %94 : vector<1x256xf32> to vector<1x256xf32>
    %129 = vector.broadcast %128 : vector<1x256xf32> to vector<16x256xf32>
    %130 = vector.broadcast %cst_38 : f32 to vector<16x256xf32>
    %131 = arith.select %127, %129, %130 : vector<16x256xi1>, vector<16x256xf32>
    %132 = arith.addf %125, %131 : vector<16x256xf32>
    %133 = arith.index_cast %c1_i32_22 : i32 to index
    %c0_39 = arith.constant 0 : index
    %c0_40 = arith.constant 0 : index
    %c0_41 = arith.constant 0 : index
    %134 = vector.load %arg3[%133, %c0_39, %c0_40, %c0_41] : memref<2x1x16x16xf32, #tpu.memory_space<vmem>>, vector<1x1x16x16xf32>
    %135 = vector.shape_cast %134 : vector<1x1x16x16xf32> to vector<16x16xf32>
    %cst_42 = arith.constant dense<0.000000e+00> : vector<16x256xf32>
    %136 = tpu.matmul %135, %119, %cst_42 {dimension_numbers = #tpu.dot_dimension_numbers<[1], [0], [0], [1], [0, 0, 1, 1], [], []>, precision = #tpu.contract_precision<fp32>} : vector<16x16xf32>, vector<16x256xf32>, vector<16x256xf32> -> vector<16x256xf32>
    %137 = arith.mulf %132, %136 : vector<16x256xf32>
    %cst_43 = arith.constant dense<0.000000e+00> : vector<256xf32>
    %138 = vector.multi_reduction <add>, %137, %cst_43 [0] : vector<16x256xf32> to vector<256xf32>
    %139 = vector.shape_cast %138 : vector<256xf32> to vector<1x256xf32>
    %140 = arith.index_cast %c1_i32_22 : i32 to index
    %c0_44 = arith.constant 0 : index
    %c0_45 = arith.constant 0 : index
    %141 = vector.load %arg5[%140, %c0_44, %c0_45] : memref<2x1x256xf32, #tpu.memory_space<vmem>>, vector<1x1x256xf32>
    %142 = vector.shape_cast %141 : vector<1x1x256xf32> to vector<1x256xf32>
    %143 = vector.shape_cast %139 : vector<1x256xf32> to vector<1x1x256xf32>
    tpu.vector_store %arg5[%140, %c0_44, %c0_45], %143 {strides = array<i32>} : memref<2x1x256xf32, #tpu.memory_space<vmem>>, vector<1x1x256xf32>,
    %c2_i32 = arith.constant 2 : i32
    return
  }
  func.func @transform_0(%arg0: i32, %arg1: i32) -> (i32, i32) {
    %c0_i32 = arith.constant 0 : i32
    %c0_i32_0 = arith.constant 0 : i32
    return %c0_i32, %arg1 : i32, i32
  }
  func.func @transform_1(%arg0: i32, %arg1: i32) -> (i32, i32, i32, i32) {
    %c0_i32 = arith.constant 0 : i32
    %c0_i32_0 = arith.constant 0 : i32
    %c0_i32_1 = arith.constant 0 : i32
    %c0_i32_2 = arith.constant 0 : i32
    return %arg0, %c0_i32, %c0_i32_0, %c0_i32_1 : i32, i32, i32, i32
  }
  func.func @transform_2(%arg0: i32, %arg1: i32) -> (i32, i32, i32) {
    %c0_i32 = arith.constant 0 : i32
    %c0_i32_0 = arith.constant 0 : i32
    return %arg0, %c0_i32, %arg1 : i32, i32, i32
  }
  func.func @transform_3(%arg0: i32, %arg1: i32) -> (i32, i32, i32) {
    %c0_i32 = arith.constant 0 : i32
    %c0_i32_0 = arith.constant 0 : i32
    return %arg0, %c0_i32, %arg1 : i32, i32, i32
  }
}

</mosaic_0001>

<llo_original>
// kernel: tpu_custom_call.1
$region0: #{tpu_custom_call.1}
  #allocation0 [shape = 'u32[]', space=smem, size = 0x4, offset = 0x4, fixed_abs, tag = 'smem constant byte address 0x4 - core index']
  #allocation1 [shape = 'u32[144,128]{1,0:T(1,128)}', space=vmem, size = 0x12000, scoped, tag = 'internal scratch']
  %s0 = inlined_call_operand.hbm [shape: f32[2,256], index: 0, kind: input, shape index: {}]
  %s1 = inlined_call_operand.hbm [shape: f32[2,1,16,16], index: 1, kind: input, shape index: {}]
  %s2 = inlined_call_operand.hbm [shape: f32[2,2,256], index: 2, kind: input, shape index: {}]
  %s3 = inlined_call_operand.hbm [shape: f32[2,1,256], index: 3, kind: output, shape index: {}]
  %s4 = sld [smem:[#allocation0]]
  $region34: #{tpu_custom_call.1} parent=0
    _
  %s6 = ssub.s32 1, %s4
  %s7 = scalar_select 0, %s6, %s4
  $region1: #{tpu_custom_call.1} parent=0
    #allocation2 [shape = 'u8[2048]{0}', space=vmem, size = 0x800, scoped, tag = 'input window, operand 0, single buffered']
    #allocation3 [shape = 's32[1]{0}', space=sflag, size = 0x4, scoped, tag = 'scoped memory for tpu_custom_call.1']
    #allocation4 [shape = 's32[1]{0}', space=sflag, size = 0x4, scoped, tag = 'scoped memory for tpu_custom_call.1']
    #allocation5 [shape = 'u8[16384]{0}', space=vmem, size = 0x4000, scoped, tag = 'input window, operand 1, single buffered']
    #allocation6 [shape = 's32[1]{0}', space=sflag, size = 0x4, scoped, tag = 'scoped memory for tpu_custom_call.1']
    #allocation7 [shape = 'u8[4096]{0}', space=vmem, size = 0x1000, scoped, tag = 'input window, operand 2, single buffered']
    #allocation8 [shape = 'u8[2048]{0}', space=vmem, size = 0x800, scoped, tag = 'output window, operand 0, single buffered']
    %8 = vsyncpa [#allocation3], 0
    %9 = vsyncpa [#allocation6], 0
    %10 = vsyncpa [#allocation4], 0
    // Predicated region
    $region2: #{tpu_custom_call.1} parent=1 // pred_check
      _
    $region3: #{tpu_custom_call.1} parent=1 // pred_check_branch
      %12 = sbr.rel (0) target = $region5
    $region4: #{tpu_custom_call.1} parent=1 // pred_region
      %s14 = ssub.s32 64, 64
      %15 = vsyncadd [#allocation3], %s14
      %s17 = sshll.u32 [#allocation2], 4
      %s18 = int_to_ptr.vmem [resolvable:$true] %s17
      %20 = dma.hbm_to_vmem [thread:$0]  %s0, 64, %s18, [#allocation3]
    $region5: #{tpu_custom_call.1} parent=1 // pred_fallthru
      _
    // Predicated region
    $region6: #{tpu_custom_call.1} parent=1 // pred_check
      _
    $region7: #{tpu_custom_call.1} parent=1 // pred_check_branch
      %22 = sbr.rel (0) target = $region9
    $region8: #{tpu_custom_call.1} parent=1 // pred_region
      %s24 = ssub.s32 512, 512
      %25 = vsyncadd [#allocation6], %s24
      %s26 = sshll.u32 [#allocation5], 4
      %s27 = int_to_ptr.vmem [resolvable:$true] %s26
      %32 = dma.hbm_to_vmem [thread:$0]  %s1, 512, %s27, [#allocation6], 128, 128, 8
    $region9: #{tpu_custom_call.1} parent=1 // pred_fallthru
      _
    // Predicated region
    $region10: #{tpu_custom_call.1} parent=1 // pred_check
      _
    $region11: #{tpu_custom_call.1} parent=1 // pred_check_branch
      %34 = sbr.rel (0) target = $region13
    $region12: #{tpu_custom_call.1} parent=1 // pred_region
      %s36 = ssub.s32 128, 128
      %37 = vsyncadd [#allocation6], %s36
      %s38 = sshll.u32 [#allocation7], 4
      %s39 = int_to_ptr.vmem [resolvable:$true] %s38
      %44 = dma.hbm_to_vmem [thread:$0]  %s2, 128, %s39, [#allocation6], 64, 64, 4
    $region13: #{tpu_custom_call.1} parent=1 // pred_fallthru
      _
    // Predicated region
    $region14: #{tpu_custom_call.1} parent=1 // pred_check
      _
    $region15: #{tpu_custom_call.1} parent=1 // pred_check_branch
      %46 = sbr.rel (0) target = $region17
    $region16: #{tpu_custom_call.1} parent=1 // pred_region
      %47 = dma.done [#allocation3], 64
    $region17: #{tpu_custom_call.1} parent=1 // pred_fallthru
      _
    // Predicated region
    $region18: #{tpu_custom_call.1} parent=1 // pred_check
      _
    $region19: #{tpu_custom_call.1} parent=1 // pred_check_branch
      %49 = sbr.rel (0) target = $region21
    $region20: #{tpu_custom_call.1} parent=1 // pred_region
      %50 = dma.done [#allocation6], 512
    $region21: #{tpu_custom_call.1} parent=1 // pred_fallthru
      _
    // Predicated region
    $region22: #{tpu_custom_call.1} parent=1 // pred_check
      _
    $region23: #{tpu_custom_call.1} parent=1 // pred_check_branch
      %52 = sbr.rel (0) target = $region25
    $region24: #{tpu_custom_call.1} parent=1 // pred_region
      %53 = dma.done [#allocation6], 128
    $region25: #{tpu_custom_call.1} parent=1 // pred_fallthru
      _
    %v54 = vld [vmem:[#allocation2] ss:$2 sm:$0x3]
    %s55 = scalar_lea.vmem [#allocation2], 1
    %v56 = vld [vmem:[%s55] ss:$2 sm:$0x3]
    %v57 = vlaneseq
    %v58 = vshrl.u32 %v57, 7
    %v59 = vadd.s32 %v58, 8
    %v60 = vld [vmem:[#allocation7] sm:$0xf]
    %v63 = vunpack.c.l.s4 1966171168
    %v64 = vunpack.c.0.s8 %v63
    %v65 = vlaneseq
    %v66 = vshrl.u32 %v65, 7
    %v67 = vsub.s32 %v64, %v66
    %v68 = vrot.slane %v60, %v67
    %v70 = vadd.f32 %v54, %v68
    %v71 = vmax.f32 %v70, 0.0
    %v72 = vmin.f32 %v71, 15.0
    %v73 = vcombine.high %v68, %v68
    %v75 = vadd.f32 %v56, %v73
    %v76 = vmax.f32 %v75, 0.0
    %v77 = vmin.f32 %v76, 15.0
    %v78 = vfloor.f32 %v72
    %v79 = vfloor.f32 %v77
    %v80 = vsub.f32 %v72, %v78
    %v81 = vsub.f32 1.0, %v80
    %v82 = vsub.f32 %v77, %v79
    %v83 = vsub.f32 1.0, %v82
    %v84 = vcvt.f32.s32.to.zero.pseudo %v78
    %v85 = vcvt.f32.s32.to.zero.pseudo %v79
    %v86 = vadd.s32 %v84, 1
    %vm87 = vcmp.lt.s32.totalorder %v86, 15
    %v88 = vsel %vm87, %v86, 15
    %v89 = vadd.s32 %v85, 1
    %vm90 = vcmp.lt.s32.totalorder %v89, 15
    %v91 = vsel %vm90, %v89, 15
    %v92 = vlaneseq
    %v93 = vshrl.u32 %v92, 7
    %v94 = vsub.s32 0, %v93
    %v95 = vrot.slane %v84, %v94
    %v96 = vlaneseq
    %v97 = vshrl.u32 %v96, 7
    %v98 = vsub.s32 1, %v97
    %v99 = vrot.slane %v84, %v98
    %vm100 = vcmp.eq.s32.totalorder %v58, %v95
    %vm101 = vcmp.eq.s32.totalorder %v58, %v99
    %vm102 = vcmp.eq.s32.totalorder %v59, %v95
    %vm103 = vcmp.eq.s32.totalorder %v59, %v99
    %v105 = vlaneseq
    %v106 = vshrl.u32 %v105, 7
    %v107 = vsub.s32 0, %v106
    %v108 = vrot.slane %v81, %v107
    %v109 = vlaneseq
    %v110 = vshrl.u32 %v109, 7
    %v111 = vsub.s32 1, %v110
    %v112 = vrot.slane %v81, %v111
    %v115 = vsel %vm100, %v108, 0.0
    %v116 = vsel %vm101, %v112, 0.0
    %v117 = vsel %vm102, %v108, 0.0
    %v118 = vsel %vm103, %v112, 0.0
    %v119 = vlaneseq
    %v120 = vshrl.u32 %v119, 7
    %v121 = vsub.s32 0, %v120
    %v122 = vrot.slane %v88, %v121
    %v123 = vlaneseq
    %v124 = vshrl.u32 %v123, 7
    %v125 = vsub.s32 1, %v124
    %v126 = vrot.slane %v88, %v125
    %vm127 = vcmp.eq.s32.totalorder %v58, %v122
    %vm128 = vcmp.eq.s32.totalorder %v58, %v126
    %vm129 = vcmp.eq.s32.totalorder %v59, %v122
    %vm130 = vcmp.eq.s32.totalorder %v59, %v126
    %v132 = vlaneseq
    %v133 = vshrl.u32 %v132, 7
    %v134 = vsub.s32 0, %v133
    %v135 = vrot.slane %v80, %v134
    %v136 = vlaneseq
    %v137 = vshrl.u32 %v136, 7
    %v138 = vsub.s32 1, %v137
    %v139 = vrot.slane %v80, %v138
    %v142 = vsel %vm127, %v135, 0.0
    %v143 = vsel %vm128, %v139, 0.0
    %v144 = vsel %vm129, %v135, 0.0
    %v145 = vsel %vm130, %v139, 0.0
    %v146 = vadd.f32 %v115, %v142
    %v147 = vadd.f32 %v116, %v143
    %v148 = vadd.f32 %v117, %v144
    %v149 = vadd.f32 %v118, %v145
    %v150 = vlaneseq
    %v151 = vshrl.u32 %v150, 7
    %v152 = vsub.s32 0, %v151
    %v153 = vrot.slane %v85, %v152
    %v154 = vlaneseq
    %v155 = vshrl.u32 %v154, 7
    %v156 = vsub.s32 1, %v155
    %v157 = vrot.slane %v85, %v156
    %vm158 = vcmp.eq.s32.totalorder %v58, %v153
    %vm159 = vcmp.eq.s32.totalorder %v58, %v157
    %vm160 = vcmp.eq.s32.totalorder %v59, %v153
    %vm161 = vcmp.eq.s32.totalorder %v59, %v157
    %v163 = vlaneseq
    %v164 = vshrl.u32 %v163, 7
    %v165 = vsub.s32 0, %v164
    %v166 = vrot.slane %v83, %v165
    %v167 = vlaneseq
    %v168 = vshrl.u32 %v167, 7
    %v169 = vsub.s32 1, %v168
    %v170 = vrot.slane %v83, %v169
    %v173 = vsel %vm158, %v166, 0.0
    %v174 = vsel %vm159, %v170, 0.0
    %v175 = vsel %vm160, %v166, 0.0
    %v176 = vsel %vm161, %v170, 0.0
    %v177 = vlaneseq
    %v178 = vshrl.u32 %v177, 7
    %v179 = vsub.s32 0, %v178
    %v180 = vrot.slane %v91, %v179
    %v181 = vlaneseq
    %v182 = vshrl.u32 %v181, 7
    %v183 = vsub.s32 1, %v182
    %v184 = vrot.slane %v91, %v183
    %vm185 = vcmp.eq.s32.totalorder %v58, %v180
    %vm186 = vcmp.eq.s32.totalorder %v58, %v184
    %vm187 = vcmp.eq.s32.totalorder %v59, %v180
    %vm188 = vcmp.eq.s32.totalorder %v59, %v184
    %v190 = vlaneseq
    %v191 = vshrl.u32 %v190, 7
    %v192 = vsub.s32 0, %v191
    %v193 = vrot.slane %v82, %v192
    %v194 = vlaneseq
    %v195 = vshrl.u32 %v194, 7
    %v196 = vsub.s32 1, %v195
    %v197 = vrot.slane %v82, %v196
    %v200 = vsel %vm185, %v193, 0.0
    %v201 = vsel %vm186, %v197, 0.0
    %v202 = vsel %vm187, %v193, 0.0
    %v203 = vsel %vm188, %v197, 0.0
    %v204 = vadd.f32 %v173, %v200
    %v205 = vadd.f32 %v174, %v201
    %v206 = vadd.f32 %v175, %v202
    %v207 = vadd.f32 %v176, %v203
    %v208 = vld [vmem:[#allocation5] sm:$0xff]
    %v209 = vld [vmem:[#allocation5 + $0x8] sm:$0xff]
    %vm210 = vcmask 130048
    %v212 = vsel %vm210, %v208, 0
    %v215 = vsel %vm210, %v209, 0
    %217 = vmatprep.subr.mxu0 0.0
    %218 = vmatpush1.msra.mxu0 0.0
    %219 = vmatprep.subr.mxu0 0.0
    %220 = vmatpush1.msra.mxu0 0.0
    %221 = vmatprep.subr.mxu0 0.0
    %222 = vmatpush1.msra.mxu0 0.0
    %223 = vmatprep.subr.mxu0 0.0
    %224 = vmatpush1.msra.mxu0 0.0
    %225 = vmatprep.subr.mxu0 0.0
    %226 = vmatpush1.msra.mxu0 0.0
    %227 = vmatprep.subr.mxu0 0.0
    %228 = vmatpush1.msra.mxu0 0.0
    %229 = vmatprep.subr.mxu0 0.0
    %230 = vmatpush1.msra.mxu0 0.0
    %231 = vmatprep.subr.mxu0 0.0
    %232 = vmatpush1.msra.mxu0 0.0
    %233 = vmatprep.subr.mxu0 0.0
    %234 = vmatpush1.msra.mxu0 0.0
    %235 = vmatprep.subr.mxu0 0.0
    %236 = vmatpush1.msra.mxu0 0.0
    %237 = vmatprep.subr.mxu0 0.0
    %238 = vmatpush1.msra.mxu0 0.0
    %239 = vmatprep.subr.mxu0 0.0
    %240 = vmatpush1.msra.mxu0 0.0
    %241 = vmatprep.subr.mxu0 0.0
    %242 = vmatpush1.msra.mxu0 0.0
    %243 = vmatprep.subr.mxu0 0.0
    %244 = vmatpush1.msra.mxu0 0.0
    %v245 = vand.u32 %v149, 4294901760
    %246 = vmatprep.subr.mxu0 %v245
    %v247 = vand.u32 %v148, 4294901760
    %248 = vmatpush1.msra.mxu0 %v247
    %v249 = vand.u32 %v147, 4294901760
    %250 = vmatprep.subr.mxu0 %v249
    %v251 = vand.u32 %v146, 4294901760
    %252 = vmatpush1.msra.mxu0 %v251
    %253 = vmatprep.subr.mxu0 0.0
    %254 = vmatpush2.msra.mxu0 0.0
    %255 = vmatprep.subr.mxu0 0.0
    %256 = vmatpush2.msra.mxu0 0.0
    %257 = vmatprep.subr.mxu0 0.0
    %258 = vmatpush2.msra.mxu0 0.0
    %259 = vmatprep.subr.mxu0 0.0
    %260 = vmatpush2.msra.mxu0 0.0
    %261 = vmatprep.subr.mxu0 0.0
    %262 = vmatpush2.msra.mxu0 0.0
    %263 = vmatprep.subr.mxu0 0.0
    %264 = vmatpush2.msra.mxu0 0.0
    %265 = vmatprep.subr.mxu0 0.0
    %266 = vmatpush2.msra.mxu0 0.0
    %267 = vmatprep.subr.mxu0 0.0
    %268 = vmatpush2.msra.mxu0 0.0
    %269 = vmatprep.subr.mxu0 0.0
    %270 = vmatpush2.msra.mxu0 0.0
    %271 = vmatprep.subr.mxu0 0.0
    %272 = vmatpush2.msra.mxu0 0.0
    %273 = vmatprep.subr.mxu0 0.0
    %274 = vmatpush2.msra.mxu0 0.0
    %275 = vmatprep.subr.mxu0 0.0
    %276 = vmatpush2.msra.mxu0 0.0
    %277 = vmatprep.subr.mxu0 0.0
    %278 = vmatpush2.msra.mxu0 0.0
    %279 = vmatprep.subr.mxu0 0.0
    %280 = vmatpush2.msra.mxu0 0.0
    %281 = vmatprep.subr.mxu0 0.0
    %282 = vmatpush2.msra.mxu0 0.0
    %283 = vmatprep.subr.mxu0 0.0
    %284 = vmatpush2.msra.mxu0 0.0
    %285 = vmatprep.mubr.f32.mxu0 0.0
    %v286 = vand.u32 %v212, 4294901760
    %v287 = vsub.f32 %v212, %v286
    %v288 = vand.u32 %v287, 4294901760
    %v289 = vsub.f32 %v287, %v288
    %v290 = vand.u32 %v289, 4294901760
    %291 = vmatmul.mubr.f32.gmra.mxu0 %v290
    %v292 = vpop.f32.mrf.mxu0
    %v293 = vadd.f32 0.0, %v292
    %v294 = vpop.f32.mrf.mxu0
    %v295 = vadd.f32 0.0, %v294
    %296 = vmatprep.mubr.f32.mxu0 0.0
    %v297 = vand.u32 %v215, 4294901760
    %v298 = vsub.f32 %v215, %v297
    %v299 = vand.u32 %v298, 4294901760
    %v300 = vsub.f32 %v298, %v299
    %v301 = vand.u32 %v300, 4294901760
    %302 = vmatmul.mubr.f32.gmra.mxu0 %v301
    %v303 = vpop.f32.mrf.mxu0
    %v304 = vadd.f32 0.0, %v303
    %v305 = vpop.f32.mrf.mxu0
    %v306 = vadd.f32 0.0, %v305
    %307 = vdwg.mxu0
    %308 = vmatprep.subr.mxu0 0.0
    %309 = vmatpush1.msra.mxu0 0.0
    %310 = vmatprep.subr.mxu0 0.0
    %311 = vmatpush1.msra.mxu0 0.0
    %312 = vmatprep.subr.mxu0 0.0
    %313 = vmatpush1.msra.mxu0 0.0
    %314 = vmatprep.subr.mxu0 0.0
    %315 = vmatpush1.msra.mxu0 0.0
    %316 = vmatprep.subr.mxu0 0.0
    %317 = vmatpush1.msra.mxu0 0.0
    %318 = vmatprep.subr.mxu0 0.0
    %319 = vmatpush1.msra.mxu0 0.0
    %320 = vmatprep.subr.mxu0 0.0
    %321 = vmatpush1.msra.mxu0 0.0
    %322 = vmatprep.subr.mxu0 0.0
    %323 = vmatpush1.msra.mxu0 0.0
    %324 = vmatprep.subr.mxu0 0.0
    %325 = vmatpush1.msra.mxu0 0.0
    %326 = vmatprep.subr.mxu0 0.0
    %327 = vmatpush1.msra.mxu0 0.0
    %328 = vmatprep.subr.mxu0 0.0
    %329 = vmatpush1.msra.mxu0 0.0
    %330 = vmatprep.subr.mxu0 0.0
    %331 = vmatpush1.msra.mxu0 0.0
    %332 = vmatprep.subr.mxu0 0.0
    %333 = vmatpush1.msra.mxu0 0.0
    %334 = vmatprep.subr.mxu0 0.0
    %335 = vmatpush1.msra.mxu0 0.0
    %v336 = vand.u32 %v149, 4294901760
    %v337 = vsub.f32 %v149, %v336
    %v338 = vand.u32 %v337, 4294901760
    %v339 = vsub.f32 %v337, %v338
    %v340 = vand.u32 %v339, 4294901760
    %341 = vmatprep.subr.mxu0 %v340
    %v342 = vand.u32 %v148, 4294901760
    %v343 = vsub.f32 %v148, %v342
    %v344 = vand.u32 %v343, 4294901760
    %v345 = vsub.f32 %v343, %v344
    %v346 = vand.u32 %v345, 4294901760
    %347 = vmatpush1.msra.mxu0 %v346
    %v348 = vand.u32 %v147, 4294901760
    %v349 = vsub.f32 %v147, %v348
    %v350 = vand.u32 %v349, 4294901760
    %v351 = vsub.f32 %v349, %v350
    %v352 = vand.u32 %v351, 4294901760
    %353 = vmatprep.subr.mxu0 %v352
    %v354 = vand.u32 %v146, 4294901760
    %v355 = vsub.f32 %v146, %v354
    %v356 = vand.u32 %v355, 4294901760
    %v357 = vsub.f32 %v355, %v356
    %v358 = vand.u32 %v357, 4294901760
    %359 = vmatpush1.msra.mxu0 %v358
    %360 = vmatprep.subr.mxu0 0.0
    %361 = vmatpush2.msra.mxu0 0.0
    %362 = vmatprep.subr.mxu0 0.0
    %363 = vmatpush2.msra.mxu0 0.0
    %364 = vmatprep.subr.mxu0 0.0
    %365 = vmatpush2.msra.mxu0 0.0
    %366 = vmatprep.subr.mxu0 0.0
    %367 = vmatpush2.msra.mxu0 0.0
    %368 = vmatprep.subr.mxu0 0.0
    %369 = vmatpush2.msra.mxu0 0.0
    %370 = vmatprep.subr.mxu0 0.0
    %371 = vmatpush2.msra.mxu0 0.0
    %372 = vmatprep.subr.mxu0 0.0
    %373 = vmatpush2.msra.mxu0 0.0
    %374 = vmatprep.subr.mxu0 0.0
    %375 = vmatpush2.msra.mxu0 0.0
    %376 = vmatprep.subr.mxu0 0.0
    %377 = vmatpush2.msra.mxu0 0.0
    %378 = vmatprep.subr.mxu0 0.0
    %379 = vmatpush2.msra.mxu0 0.0
    %380 = vmatprep.subr.mxu0 0.0
    %381 = vmatpush2.msra.mxu0 0.0
    %382 = vmatprep.subr.mxu0 0.0
    %383 = vmatpush2.msra.mxu0 0.0
    %384 = vmatprep.subr.mxu0 0.0
    %385 = vmatpush2.msra.mxu0 0.0
    %386 = vmatprep.subr.mxu0 0.0
    %387 = vmatpush2.msra.mxu0 0.0
    %388 = vmatprep.subr.mxu0 0.0
    %389 = vmatpush2.msra.mxu0 0.0
    %390 = vmatprep.subr.mxu0 0.0
    %391 = vmatpush2.msra.mxu0 0.0
    %392 = vmatprep.mubr.f32.mxu0 0.0
    %v393 = vand.u32 %v212, 4294901760
    %394 = vmatmul.mubr.f32.gmra.mxu0 %v393
    %v395 = vpop.f32.mrf.mxu0
    %v396 = vadd.f32 %v293, %v395
    %v397 = vpop.f32.mrf.mxu0
    %v398 = vadd.f32 %v295, %v397
    %399 = vmatprep.mubr.f32.mxu0 0.0
    %v400 = vand.u32 %v215, 4294901760
    %401 = vmatmul.mubr.f32.gmra.mxu0 %v400
    %v402 = vpop.f32.mrf.mxu0
    %v403 = vadd.f32 %v304, %v402
    %v404 = vpop.f32.mrf.mxu0
    %v405 = vadd.f32 %v306, %v404
    %406 = vdwg.mxu0
    %407 = vmatprep.subr.mxu0 0.0
    %408 = vmatpush1.msra.mxu0 0.0
    %409 = vmatprep.subr.mxu0 0.0
    %410 = vmatpush1.msra.mxu0 0.0
    %411 = vmatprep.subr.mxu0 0.0
    %412 = vmatpush1.msra.mxu0 0.0
    %413 = vmatprep.subr.mxu0 0.0
    %414 = vmatpush1.msra.mxu0 0.0
    %415 = vmatprep.subr.mxu0 0.0
    %416 = vmatpush1.msra.mxu0 0.0
    %417 = vmatprep.subr.mxu0 0.0
    %418 = vmatpush1.msra.mxu0 0.0
    %419 = vmatprep.subr.mxu0 0.0
    %420 = vmatpush1.msra.mxu0 0.0
    %421 = vmatprep.subr.mxu0 0.0
    %422 = vmatpush1.msra.mxu0 0.0
    %423 = vmatprep.subr.mxu0 0.0
    %424 = vmatpush1.msra.mxu0 0.0
    %425 = vmatprep.subr.mxu0 0.0
    %426 = vmatpush1.msra.mxu0 0.0
    %427 = vmatprep.subr.mxu0 0.0
    %428 = vmatpush1.msra.mxu0 0.0
    %429 = vmatprep.subr.mxu0 0.0
    %430 = vmatpush1.msra.mxu0 0.0
    %431 = vmatprep.subr.mxu0 0.0
    %432 = vmatpush1.msra.mxu0 0.0
    %433 = vmatprep.subr.mxu0 0.0
    %434 = vmatpush1.msra.mxu0 0.0
    %v435 = vand.u32 %v149, 4294901760
    %v436 = vsub.f32 %v149, %v435
    %437 = vmatprep.subr.mxu0 %v436
    %v438 = vand.u32 %v148, 4294901760
    %v439 = vsub.f32 %v148, %v438
    %440 = vmatpush1.msra.mxu0 %v439
    %v441 = vand.u32 %v147, 4294901760
    %v442 = vsub.f32 %v147, %v441
    %443 = vmatprep.subr.mxu0 %v442
    %v444 = vand.u32 %v146, 4294901760
    %v445 = vsub.f32 %v146, %v444
    %446 = vmatpush1.msra.mxu0 %v445
    %447 = vmatprep.subr.mxu0 0.0
    %448 = vmatpush2.msra.mxu0 0.0
    %449 = vmatprep.subr.mxu0 0.0
    %450 = vmatpush2.msra.mxu0 0.0
    %451 = vmatprep.subr.mxu0 0.0
    %452 = vmatpush2.msra.mxu0 0.0
    %453 = vmatprep.subr.mxu0 0.0
    %454 = vmatpush2.msra.mxu0 0.0
    %455 = vmatprep.subr.mxu0 0.0
    %456 = vmatpush2.msra.mxu0 0.0
    %457 = vmatprep.subr.mxu0 0.0
    %458 = vmatpush2.msra.mxu0 0.0
    %459 = vmatprep.subr.mxu0 0.0
    %460 = vmatpush2.msra.mxu0 0.0
    %461 = vmatprep.subr.mxu0 0.0
    %462 = vmatpush2.msra.mxu0 0.0
    %463 = vmatprep.subr.mxu0 0.0
    %464 = vmatpush2.msra.mxu0 0.0
    %465 = vmatprep.subr.mxu0 0.0
    %466 = vmatpush2.msra.mxu0 0.0
    %467 = vmatprep.subr.mxu0 0.0
    %468 = vmatpush2.msra.mxu0 0.0
    %469 = vmatprep.subr.mxu0 0.0
    %470 = vmatpush2.msra.mxu0 0.0
    %471 = vmatprep.subr.mxu0 0.0
    %472 = vmatpush2.msra.mxu0 0.0
    %473 = vmatprep.subr.mxu0 0.0
    %474 = vmatpush2.msra.mxu0 0.0
    %475 = vmatprep.subr.mxu0 0.0
    %476 = vmatpush2.msra.mxu0 0.0
    %477 = vmatprep.subr.mxu0 0.0
    %478 = vmatpush2.msra.mxu0 0.0
    %479 = vmatprep.mubr.f32.mxu0 0.0
    %v480 = vand.u32 %v212, 4294901760
    %v481 = vsub.f32 %v212, %v480
    %482 = vmatmul.mubr.f32.gmra.mxu0 %v481
    %v483 = vpop.f32.mrf.mxu0
    %v484 = vadd.f32 %v396, %v483
    %v485 = vpop.f32.mrf.mxu0
    %v486 = vadd.f32 %v398, %v485
    %487 = vmatprep.mubr.f32.mxu0 0.0
    %v488 = vand.u32 %v215, 4294901760
    %v489 = vsub.f32 %v215, %v488
    %490 = vmatmul.mubr.f32.gmra.mxu0 %v489
    %v491 = vpop.f32.mrf.mxu0
    %v492 = vadd.f32 %v403, %v491
    %v493 = vpop.f32.mrf.mxu0
    %v494 = vadd.f32 %v405, %v493
    %495 = vdwg.mxu0
    %496 = vmatprep.subr.mxu0 0.0
    %497 = vmatpush1.msra.mxu0 0.0
    %498 = vmatprep.subr.mxu0 0.0
    %499 = vmatpush1.msra.mxu0 0.0
    %500 = vmatprep.subr.mxu0 0.0
    %501 = vmatpush1.msra.mxu0 0.0
    %502 = vmatprep.subr.mxu0 0.0
    %503 = vmatpush1.msra.mxu0 0.0
    %504 = vmatprep.subr.mxu0 0.0
    %505 = vmatpush1.msra.mxu0 0.0
    %506 = vmatprep.subr.mxu0 0.0
    %507 = vmatpush1.msra.mxu0 0.0
    %508 = vmatprep.subr.mxu0 0.0
    %509 = vmatpush1.msra.mxu0 0.0
    %510 = vmatprep.subr.mxu0 0.0
    %511 = vmatpush1.msra.mxu0 0.0
    %512 = vmatprep.subr.mxu0 0.0
    %513 = vmatpush1.msra.mxu0 0.0
    %514 = vmatprep.subr.mxu0 0.0
    %515 = vmatpush1.msra.mxu0 0.0
    %516 = vmatprep.subr.mxu0 0.0
    %517 = vmatpush1.msra.mxu0 0.0
    %518 = vmatprep.subr.mxu0 0.0
    %519 = vmatpush1.msra.mxu0 0.0
    %520 = vmatprep.subr.mxu0 0.0
    %521 = vmatpush1.msra.mxu0 0.0
    %522 = vmatprep.subr.mxu0 0.0
    %523 = vmatpush1.msra.mxu0 0.0
    %v524 = vand.u32 %v149, 4294901760
    %525 = vmatprep.subr.mxu0 %v524
    %v526 = vand.u32 %v148, 4294901760
    %527 = vmatpush1.msra.mxu0 %v526
    %v528 = vand.u32 %v147, 4294901760
    %529 = vmatprep.subr.mxu0 %v528
    %v530 = vand.u32 %v146, 4294901760
    %531 = vmatpush1.msra.mxu0 %v530
    %532 = vmatprep.subr.mxu0 0.0
    %533 = vmatpush2.msra.mxu0 0.0
    %534 = vmatprep.subr.mxu0 0.0
    %535 = vmatpush2.msra.mxu0 0.0
    %536 = vmatprep.subr.mxu0 0.0
    %537 = vmatpush2.msra.mxu0 0.0
    %538 = vmatprep.subr.mxu0 0.0
    %539 = vmatpush2.msra.mxu0 0.0
    %540 = vmatprep.subr.mxu0 0.0
    %541 = vmatpush2.msra.mxu0 0.0
    %542 = vmatprep.subr.mxu0 0.0
    %543 = vmatpush2.msra.mxu0 0.0
    %544 = vmatprep.subr.mxu0 0.0
    %545 = vmatpush2.msra.mxu0 0.0
    %546 = vmatprep.subr.mxu0 0.0
    %547 = vmatpush2.msra.mxu0 0.0
    %548 = vmatprep.subr.mxu0 0.0
    %549 = vmatpush2.msra.mxu0 0.0
    %550 = vmatprep.subr.mxu0 0.0
    %551 = vmatpush2.msra.mxu0 0.0
    %552 = vmatprep.subr.mxu0 0.0
    %553 = vmatpush2.msra.mxu0 0.0
    %554 = vmatprep.subr.mxu0 0.0
    %555 = vmatpush2.msra.mxu0 0.0
    %556 = vmatprep.subr.mxu0 0.0
    %557 = vmatpush2.msra.mxu0 0.0
    %558 = vmatprep.subr.mxu0 0.0
    %559 = vmatpush2.msra.mxu0 0.0
    %560 = vmatprep.subr.mxu0 0.0
    %561 = vmatpush2.msra.mxu0 0.0
    %562 = vmatprep.subr.mxu0 0.0
    %563 = vmatpush2.msra.mxu0 0.0
    %564 = vmatprep.mubr.f32.mxu0 0.0
    %v565 = vand.u32 %v212, 4294901760
    %v566 = vsub.f32 %v212, %v565
    %v567 = vand.u32 %v566, 4294901760
    %568 = vmatmul.mubr.f32.gmra.mxu0 %v567
    %v569 = vpop.f32.mrf.mxu0
    %v570 = vadd.f32 %v484, %v569
    %v571 = vpop.f32.mrf.mxu0
    %v572 = vadd.f32 %v486, %v571
    %573 = vmatprep.mubr.f32.mxu0 0.0
    %v574 = vand.u32 %v215, 4294901760
    %v575 = vsub.f32 %v215, %v574
    %v576 = vand.u32 %v575, 4294901760
    %577 = vmatmul.mubr.f32.gmra.mxu0 %v576
    %v578 = vpop.f32.mrf.mxu0
    %v579 = vadd.f32 %v492, %v578
    %v580 = vpop.f32.mrf.mxu0
    %v581 = vadd.f32 %v494, %v580
    %582 = vdwg.mxu0
    %583 = vmatprep.subr.mxu0 0.0
    %584 = vmatpush1.msra.mxu0 0.0
    %585 = vmatprep.subr.mxu0 0.0
    %586 = vmatpush1.msra.mxu0 0.0
    %587 = vmatprep.subr.mxu0 0.0
    %588 = vmatpush1.msra.mxu0 0.0
    %589 = vmatprep.subr.mxu0 0.0
    %590 = vmatpush1.msra.mxu0 0.0
    %591 = vmatprep.subr.mxu0 0.0
    %592 = vmatpush1.msra.mxu0 0.0
    %593 = vmatprep.subr.mxu0 0.0
    %594 = vmatpush1.msra.mxu0 0.0
    %595 = vmatprep.subr.mxu0 0.0
    %596 = vmatpush1.msra.mxu0 0.0
    %597 = vmatprep.subr.mxu0 0.0
    %598 = vmatpush1.msra.mxu0 0.0
    %599 = vmatprep.subr.mxu0 0.0
    %600 = vmatpush1.msra.mxu0 0.0
    %601 = vmatprep.subr.mxu0 0.0
    %602 = vmatpush1.msra.mxu0 0.0
    %603 = vmatprep.subr.mxu0 0.0
    %604 = vmatpush1.msra.mxu0 0.0
    %605 = vmatprep.subr.mxu0 0.0
    %606 = vmatpush1.msra.mxu0 0.0
    %607 = vmatprep.subr.mxu0 0.0
    %608 = vmatpush1.msra.mxu0 0.0
    %609 = vmatprep.subr.mxu0 0.0
    %610 = vmatpush1.msra.mxu0 0.0
    %v611 = vand.u32 %v149, 4294901760
    %v612 = vsub.f32 %v149, %v611
    %v613 = vand.u32 %v612, 4294901760
    %614 = vmatprep.subr.mxu0 %v613
    %v615 = vand.u32 %v148, 4294901760
    %v616 = vsub.f32 %v148, %v615
    %v617 = vand.u32 %v616, 4294901760
    %618 = vmatpush1.msra.mxu0 %v617
    %v619 = vand.u32 %v147, 4294901760
    %v620 = vsub.f32 %v147, %v619
    %v621 = vand.u32 %v620, 4294901760
    %622 = vmatprep.subr.mxu0 %v621
    %v623 = vand.u32 %v146, 4294901760
    %v624 = vsub.f32 %v146, %v623
    %v625 = vand.u32 %v624, 4294901760
    %626 = vmatpush1.msra.mxu0 %v625
    %627 = vmatprep.subr.mxu0 0.0
    %628 = vmatpush2.msra.mxu0 0.0
    %629 = vmatprep.subr.mxu0 0.0
    %630 = vmatpush2.msra.mxu0 0.0
    %631 = vmatprep.subr.mxu0 0.0
    %632 = vmatpush2.msra.mxu0 0.0
    %633 = vmatprep.subr.mxu0 0.0
    %634 = vmatpush2.msra.mxu0 0.0
    %635 = vmatprep.subr.mxu0 0.0
    %636 = vmatpush2.msra.mxu0 0.0
    %637 = vmatprep.subr.mxu0 0.0
    %638 = vmatpush2.msra.mxu0 0.0
    %639 = vmatprep.subr.mxu0 0.0
    %640 = vmatpush2.msra.mxu0 0.0
    %641 = vmatprep.subr.mxu0 0.0
    %642 = vmatpush2.msra.mxu0 0.0
    %643 = vmatprep.subr.mxu0 0.0
    %644 = vmatpush2.msra.mxu0 0.0
    %645 = vmatprep.subr.mxu0 0.0
    %646 = vmatpush2.msra.mxu0 0.0
    %647 = vmatprep.subr.mxu0 0.0
    %648 = vmatpush2.msra.mxu0 0.0
    %649 = vmatprep.subr.mxu0 0.0
    %650 = vmatpush2.msra.mxu0 0.0
    %651 = vmatprep.subr.mxu0 0.0
    %652 = vmatpush2.msra.mxu0 0.0
    %653 = vmatprep.subr.mxu0 0.0
    %654 = vmatpush2.msra.mxu0 0.0
    %655 = vmatprep.subr.mxu0 0.0
    %656 = vmatpush2.msra.mxu0 0.0
    %657 = vmatprep.subr.mxu0 0.0
    %658 = vmatpush2.msra.mxu0 0.0
    %659 = vmatprep.mubr.f32.mxu0 0.0
    %v660 = vand.u32 %v212, 4294901760
    %661 = vmatmul.mubr.f32.gmra.mxu0 %v660
    %v662 = vpop.f32.mrf.mxu0
    %v663 = vadd.f32 %v570, %v662
    %v664 = vpop.f32.mrf.mxu0
    %v665 = vadd.f32 %v572, %v664
    %666 = vmatprep.mubr.f32.mxu0 0.0
    %v667 = vand.u32 %v215, 4294901760
    %668 = vmatmul.mubr.f32.gmra.mxu0 %v667
    %v669 = vpop.f32.mrf.mxu0
    %v670 = vadd.f32 %v579, %v669
    %v671 = vpop.f32.mrf.mxu0
    %v672 = vadd.f32 %v581, %v671
    %673 = vdwg.mxu0
    %674 = vmatprep.subr.mxu0 0.0
    %675 = vmatpush1.msra.mxu0 0.0
    %676 = vmatprep.subr.mxu0 0.0
    %677 = vmatpush1.msra.mxu0 0.0
    %678 = vmatprep.subr.mxu0 0.0
    %679 = vmatpush1.msra.mxu0 0.0
    %680 = vmatprep.subr.mxu0 0.0
    %681 = vmatpush1.msra.mxu0 0.0
    %682 = vmatprep.subr.mxu0 0.0
    %683 = vmatpush1.msra.mxu0 0.0
    %684 = vmatprep.subr.mxu0 0.0
    %685 = vmatpush1.msra.mxu0 0.0
    %686 = vmatprep.subr.mxu0 0.0
    %687 = vmatpush1.msra.mxu0 0.0
    %688 = vmatprep.subr.mxu0 0.0
    %689 = vmatpush1.msra.mxu0 0.0
    %690 = vmatprep.subr.mxu0 0.0
    %691 = vmatpush1.msra.mxu0 0.0
    %692 = vmatprep.subr.mxu0 0.0
    %693 = vmatpush1.msra.mxu0 0.0
    %694 = vmatprep.subr.mxu0 0.0
    %695 = vmatpush1.msra.mxu0 0.0
    %696 = vmatprep.subr.mxu0 0.0
    %697 = vmatpush1.msra.mxu0 0.0
    %698 = vmatprep.subr.mxu0 0.0
    %699 = vmatpush1.msra.mxu0 0.0
    %700 = vmatprep.subr.mxu0 0.0
    %701 = vmatpush1.msra.mxu0 0.0
    %v702 = vand.u32 %v149, 4294901760
    %703 = vmatprep.subr.mxu0 %v702
    %v704 = vand.u32 %v148, 4294901760
    %705 = vmatpush1.msra.mxu0 %v704
    %v706 = vand.u32 %v147, 4294901760
    %707 = vmatprep.subr.mxu0 %v706
    %v708 = vand.u32 %v146, 4294901760
    %709 = vmatpush1.msra.mxu0 %v708
    %710 = vmatprep.subr.mxu0 0.0
    %711 = vmatpush2.msra.mxu0 0.0
    %712 = vmatprep.subr.mxu0 0.0
    %713 = vmatpush2.msra.mxu0 0.0
    %714 = vmatprep.subr.mxu0 0.0
    %715 = vmatpush2.msra.mxu0 0.0
    %716 = vmatprep.subr.mxu0 0.0
    %717 = vmatpush2.msra.mxu0 0.0
    %718 = vmatprep.subr.mxu0 0.0
    %719 = vmatpush2.msra.mxu0 0.0
    %720 = vmatprep.subr.mxu0 0.0
    %721 = vmatpush2.msra.mxu0 0.0
    %722 = vmatprep.subr.mxu0 0.0
    %723 = vmatpush2.msra.mxu0 0.0
    %724 = vmatprep.subr.mxu0 0.0
    %725 = vmatpush2.msra.mxu0 0.0
    %726 = vmatprep.subr.mxu0 0.0
    %727 = vmatpush2.msra.mxu0 0.0
    %728 = vmatprep.subr.mxu0 0.0
    %729 = vmatpush2.msra.mxu0 0.0
    %730 = vmatprep.subr.mxu0 0.0
    %731 = vmatpush2.msra.mxu0 0.0
    %732 = vmatprep.subr.mxu0 0.0
    %733 = vmatpush2.msra.mxu0 0.0
    %734 = vmatprep.subr.mxu0 0.0
    %735 = vmatpush2.msra.mxu0 0.0
    %736 = vmatprep.subr.mxu0 0.0
    %737 = vmatpush2.msra.mxu0 0.0
    %738 = vmatprep.subr.mxu0 0.0
    %739 = vmatpush2.msra.mxu0 0.0
    %740 = vmatprep.subr.mxu0 0.0
    %741 = vmatpush2.msra.mxu0 0.0
    %742 = vmatprep.mubr.f32.mxu0 0.0
    %v743 = vand.u32 %v212, 4294901760
    %744 = vmatmul.mubr.f32.gmra.mxu0 %v743
    %v745 = vpop.f32.mrf.mxu0
    %v746 = vadd.f32 %v663, %v745
    %v747 = vpop.f32.mrf.mxu0
    %v748 = vadd.f32 %v665, %v747
    %749 = vmatprep.mubr.f32.mxu0 0.0
    %v750 = vand.u32 %v215, 4294901760
    %751 = vmatmul.mubr.f32.gmra.mxu0 %v750
    %v752 = vpop.f32.mrf.mxu0
    %v753 = vadd.f32 %v670, %v752
    %v754 = vpop.f32.mrf.mxu0
    %v755 = vadd.f32 %v672, %v754
    %756 = vdwg.mxu0
    %v757 = vmul.f32 %v204, %v746
    %v758 = vmul.f32 %v205, %v748
    %v759 = vmul.f32 %v206, %v753
    %v760 = vmul.f32 %v207, %v755
    %v761 = vadd.f32 %v757, %v759
    %v762 = vrot.slane %v761, 4
    %v763 = vadd.f32 %v761, %v762
    %v764 = vrot.slane %v763, 2
    %v765 = vadd.f32 %v763, %v764
    %v766 = vrot.slane %v765, 1
    %v767 = vadd.f32 %v765, %v766
    %v768 = vadd.f32 %v758, %v760
    %v769 = vrot.slane %v768, 4
    %v770 = vadd.f32 %v768, %v769
    %v771 = vrot.slane %v770, 2
    %v772 = vadd.f32 %v770, %v771
    %v773 = vrot.slane %v772, 1
    %v774 = vadd.f32 %v772, %v773
    %v777 = vcombine.low %v767, %v774
    %v779 = vunpack.c.l.s4 1966171168
    %v780 = vunpack.c.0.s8 %v779
    %v781 = vlaneseq
    %v782 = vshrl.u32 %v781, 7
    %v783 = vsub.s32 %v780, %v782
    %v784 = vrot.slane %v777, %v783
    %v786 = vunpack.c.l.s4 1966171168
    %v787 = vunpack.c.0.s8 %v786
    %v788 = vlaneseq
    %v789 = vshrl.u32 %v788, 7
    %v790 = vsub.s32 %v787, %v789
    %v791 = vrot.slane %v784, %v790
    %v793 = vlaneseq
    %vm794 = vcmp.ge.s32.totalorder %v793, 0
    %vm795 = vcmp.lt.s32.totalorder %v793, 256
    %vm796 = vmand %vm794, %vm795
    %797 = vst.msk [vmem:[#allocation8] sm:$0x3] %vm796, %v791
    %s798 = scalar_lea.vmem [#allocation7], 4
    %v799 = vld [vmem:[%s798] sm:$0xf]
    %v802 = vunpack.c.l.s4 1966171168
    %v803 = vunpack.c.0.s8 %v802
    %v804 = vlaneseq
    %v805 = vshrl.u32 %v804, 7
    %v806 = vsub.s32 %v803, %v805
    %v807 = vrot.slane %v799, %v806
    %v809 = vadd.f32 %v54, %v807
    %v810 = vmax.f32 %v809, 0.0
    %v811 = vmin.f32 %v810, 15.0
    %v812 = vcombine.high %v807, %v807
    %v814 = vadd.f32 %v56, %v812
    %v815 = vmax.f32 %v814, 0.0
    %v816 = vmin.f32 %v815, 15.0
    %v817 = vfloor.f32 %v811
    %v818 = vfloor.f32 %v816
    %v819 = vsub.f32 %v811, %v817
    %v820 = vsub.f32 1.0, %v819
    %v821 = vsub.f32 %v816, %v818
    %v822 = vsub.f32 1.0, %v821
    %v823 = vcvt.f32.s32.to.zero.pseudo %v817
    %v824 = vcvt.f32.s32.to.zero.pseudo %v818
    %v825 = vadd.s32 %v823, 1
    %vm826 = vcmp.lt.s32.totalorder %v825, 15
    %v827 = vsel %vm826, %v825, 15
    %v828 = vadd.s32 %v824, 1
    %vm829 = vcmp.lt.s32.totalorder %v828, 15
    %v830 = vsel %vm829, %v828, 15
    %v831 = vlaneseq
    %v832 = vshrl.u32 %v831, 7
    %v833 = vsub.s32 0, %v832
    %v834 = vrot.slane %v823, %v833
    %v835 = vlaneseq
    %v836 = vshrl.u32 %v835, 7
    %v837 = vsub.s32 1, %v836
    %v838 = vrot.slane %v823, %v837
    %vm839 = vcmp.eq.s32.totalorder %v58, %v834
    %vm840 = vcmp.eq.s32.totalorder %v58, %v838
    %vm841 = vcmp.eq.s32.totalorder %v59, %v834
    %vm842 = vcmp.eq.s32.totalorder %v59, %v838
    %v844 = vlaneseq
    %v845 = vshrl.u32 %v844, 7
    %v846 = vsub.s32 0, %v845
    %v847 = vrot.slane %v820, %v846
    %v848 = vlaneseq
    %v849 = vshrl.u32 %v848, 7
    %v850 = vsub.s32 1, %v849
    %v851 = vrot.slane %v820, %v850
    %v854 = vsel %vm839, %v847, 0.0
    %v855 = vsel %vm840, %v851, 0.0
    %v856 = vsel %vm841, %v847, 0.0
    %v857 = vsel %vm842, %v851, 0.0
    %v858 = vlaneseq
    %v859 = vshrl.u32 %v858, 7
    %v860 = vsub.s32 0, %v859
    %v861 = vrot.slane %v827, %v860
    %v862 = vlaneseq
    %v863 = vshrl.u32 %v862, 7
    %v864 = vsub.s32 1, %v863
    %v865 = vrot.slane %v827, %v864
    %vm866 = vcmp.eq.s32.totalorder %v58, %v861
    %vm867 = vcmp.eq.s32.totalorder %v58, %v865
    %vm868 = vcmp.eq.s32.totalorder %v59, %v861
    %vm869 = vcmp.eq.s32.totalorder %v59, %v865
    %v871 = vlaneseq
    %v872 = vshrl.u32 %v871, 7
    %v873 = vsub.s32 0, %v872
    %v874 = vrot.slane %v819, %v873
    %v875 = vlaneseq
    %v876 = vshrl.u32 %v875, 7
    %v877 = vsub.s32 1, %v876
    %v878 = vrot.slane %v819, %v877
    %v881 = vsel %vm866, %v874, 0.0
    %v882 = vsel %vm867, %v878, 0.0
    %v883 = vsel %vm868, %v874, 0.0
    %v884 = vsel %vm869, %v878, 0.0
    %v885 = vadd.f32 %v854, %v881
    %v886 = vadd.f32 %v855, %v882
    %v887 = vadd.f32 %v856, %v883
    %v888 = vadd.f32 %v857, %v884
    %v889 = vlaneseq
    %v890 = vshrl.u32 %v889, 7
    %v891 = vsub.s32 0, %v890
    %v892 = vrot.slane %v824, %v891
    %v893 = vlaneseq
    %v894 = vshrl.u32 %v893, 7
    %v895 = vsub.s32 1, %v894
    %v896 = vrot.slane %v824, %v895
    %vm897 = vcmp.eq.s32.totalorder %v58, %v892
    %vm898 = vcmp.eq.s32.totalorder %v58, %v896
    %vm899 = vcmp.eq.s32.totalorder %v59, %v892
    %vm900 = vcmp.eq.s32.totalorder %v59, %v896
    %v902 = vlaneseq
    %v903 = vshrl.u32 %v902, 7
    %v904 = vsub.s32 0, %v903
    %v905 = vrot.slane %v822, %v904
    %v906 = vlaneseq
    %v907 = vshrl.u32 %v906, 7
    %v908 = vsub.s32 1, %v907
    %v909 = vrot.slane %v822, %v908
    %v912 = vsel %vm897, %v905, 0.0
    %v913 = vsel %vm898, %v909, 0.0
    %v914 = vsel %vm899, %v905, 0.0
    %v915 = vsel %vm900, %v909, 0.0
    %v916 = vlaneseq
    %v917 = vshrl.u32 %v916, 7
    %v918 = vsub.s32 0, %v917
    %v919 = vrot.slane %v830, %v918
    %v920 = vlaneseq
    %v921 = vshrl.u32 %v920, 7
    %v922 = vsub.s32 1, %v921
    %v923 = vrot.slane %v830, %v922
    %vm924 = vcmp.eq.s32.totalorder %v58, %v919
    %vm925 = vcmp.eq.s32.totalorder %v58, %v923
    %vm926 = vcmp.eq.s32.totalorder %v59, %v919
    %vm927 = vcmp.eq.s32.totalorder %v59, %v923
    %v929 = vlaneseq
    %v930 = vshrl.u32 %v929, 7
    %v931 = vsub.s32 0, %v930
    %v932 = vrot.slane %v821, %v931
    %v933 = vlaneseq
    %v934 = vshrl.u32 %v933, 7
    %v935 = vsub.s32 1, %v934
    %v936 = vrot.slane %v821, %v935
    %v939 = vsel %vm924, %v932, 0.0
    %v940 = vsel %vm925, %v936, 0.0
    %v941 = vsel %vm926, %v932, 0.0
    %v942 = vsel %vm927, %v936, 0.0
    %v943 = vadd.f32 %v912, %v939
    %v944 = vadd.f32 %v913, %v940
    %v945 = vadd.f32 %v914, %v941
    %v946 = vadd.f32 %v915, %v942
    %s947 = scalar_lea.vmem [#allocation5], 16
    %v948 = vld [vmem:[%s947] sm:$0xff]
    %v949 = vld [vmem:[%s947 + $0x8] sm:$0xff]
    %v951 = vsel %vm210, %v948, 0
    %v954 = vsel %vm210, %v949, 0
    %956 = vmatprep.subr.mxu0 0.0
    %957 = vmatpush1.msra.mxu0 0.0
    %958 = vmatprep.subr.mxu0 0.0
    %959 = vmatpush1.msra.mxu0 0.0
    %960 = vmatprep.subr.mxu0 0.0
    %961 = vmatpush1.msra.mxu0 0.0
    %962 = vmatprep.subr.mxu0 0.0
    %963 = vmatpush1.msra.mxu0 0.0
    %964 = vmatprep.subr.mxu0 0.0
    %965 = vmatpush1.msra.mxu0 0.0
    %966 = vmatprep.subr.mxu0 0.0
    %967 = vmatpush1.msra.mxu0 0.0
    %968 = vmatprep.subr.mxu0 0.0
    %969 = vmatpush1.msra.mxu0 0.0
    %970 = vmatprep.subr.mxu0 0.0
    %971 = vmatpush1.msra.mxu0 0.0
    %972 = vmatprep.subr.mxu0 0.0
    %973 = vmatpush1.msra.mxu0 0.0
    %974 = vmatprep.subr.mxu0 0.0
    %975 = vmatpush1.msra.mxu0 0.0
    %976 = vmatprep.subr.mxu0 0.0
    %977 = vmatpush1.msra.mxu0 0.0
    %978 = vmatprep.subr.mxu0 0.0
    %979 = vmatpush1.msra.mxu0 0.0
    %980 = vmatprep.subr.mxu0 0.0
    %981 = vmatpush1.msra.mxu0 0.0
    %982 = vmatprep.subr.mxu0 0.0
    %983 = vmatpush1.msra.mxu0 0.0
    %v984 = vand.u32 %v888, 4294901760
    %985 = vmatprep.subr.mxu0 %v984
    %v986 = vand.u32 %v887, 4294901760
    %987 = vmatpush1.msra.mxu0 %v986
    %v988 = vand.u32 %v886, 4294901760
    %989 = vmatprep.subr.mxu0 %v988
    %v990 = vand.u32 %v885, 4294901760
    %991 = vmatpush1.msra.mxu0 %v990
    %992 = vmatprep.subr.mxu0 0.0
    %993 = vmatpush2.msra.mxu0 0.0
    %994 = vmatprep.subr.mxu0 0.0
    %995 = vmatpush2.msra.mxu0 0.0
    %996 = vmatprep.subr.mxu0 0.0
    %997 = vmatpush2.msra.mxu0 0.0
    %998 = vmatprep.subr.mxu0 0.0
    %999 = vmatpush2.msra.mxu0 0.0
    %1000 = vmatprep.subr.mxu0 0.0
    %1001 = vmatpush2.msra.mxu0 0.0
    %1002 = vmatprep.subr.mxu0 0.0
    %1003 = vmatpush2.msra.mxu0 0.0
    %1004 = vmatprep.subr.mxu0 0.0
    %1005 = vmatpush2.msra.mxu0 0.0
    %1006 = vmatprep.subr.mxu0 0.0
    %1007 = vmatpush2.msra.mxu0 0.0
    %1008 = vmatprep.subr.mxu0 0.0
    %1009 = vmatpush2.msra.mxu0 0.0
    %1010 = vmatprep.subr.mxu0 0.0
    %1011 = vmatpush2.msra.mxu0 0.0
    %1012 = vmatprep.subr.mxu0 0.0
    %1013 = vmatpush2.msra.mxu0 0.0
    %1014 = vmatprep.subr.mxu0 0.0
    %1015 = vmatpush2.msra.mxu0 0.0
    %1016 = vmatprep.subr.mxu0 0.0
    %1017 = vmatpush2.msra.mxu0 0.0
    %1018 = vmatprep.subr.mxu0 0.0
    %1019 = vmatpush2.msra.mxu0 0.0
    %1020 = vmatprep.subr.mxu0 0.0
    %1021 = vmatpush2.msra.mxu0 0.0
    %1022 = vmatprep.subr.mxu0 0.0
    %1023 = vmatpush2.msra.mxu0 0.0
    %1024 = vmatprep.mubr.f32.mxu0 0.0
    %v1025 = vand.u32 %v951, 4294901760
    %v1026 = vsub.f32 %v951, %v1025
    %v1027 = vand.u32 %v1026, 4294901760
    %v1028 = vsub.f32 %v1026, %v1027
    %v1029 = vand.u32 %v1028, 4294901760
    %1030 = vmatmul.mubr.f32.gmra.mxu0 %v1029
    %v1031 = vpop.f32.mrf.mxu0
    %v1032 = vadd.f32 0.0, %v1031
    %v1033 = vpop.f32.mrf.mxu0
    %v1034 = vadd.f32 0.0, %v1033
    %1035 = vmatprep.mubr.f32.mxu0 0.0
    %v1036 = vand.u32 %v954, 4294901760
    %v1037 = vsub.f32 %v954, %v1036
    %v1038 = vand.u32 %v1037, 4294901760
    %v1039 = vsub.f32 %v1037, %v1038
    %v1040 = vand.u32 %v1039, 4294901760
    %1041 = vmatmul.mubr.f32.gmra.mxu0 %v1040
    %v1042 = vpop.f32.mrf.mxu0
    %v1043 = vadd.f32 0.0, %v1042
    %v1044 = vpop.f32.mrf.mxu0
    %v1045 = vadd.f32 0.0, %v1044
    %1046 = vdwg.mxu0
    %1047 = vmatprep.subr.mxu0 0.0
    %1048 = vmatpush1.msra.mxu0 0.0
    %1049 = vmatprep.subr.mxu0 0.0
    %1050 = vmatpush1.msra.mxu0 0.0
    %1051 = vmatprep.subr.mxu0 0.0
    %1052 = vmatpush1.msra.mxu0 0.0
    %1053 = vmatprep.subr.mxu0 0.0
    %1054 = vmatpush1.msra.mxu0 0.0
    %1055 = vmatprep.subr.mxu0 0.0
    %1056 = vmatpush1.msra.mxu0 0.0
    %1057 = vmatprep.subr.mxu0 0.0
    %1058 = vmatpush1.msra.mxu0 0.0
    %1059 = vmatprep.subr.mxu0 0.0
    %1060 = vmatpush1.msra.mxu0 0.0
    %1061 = vmatprep.subr.mxu0 0.0
    %1062 = vmatpush1.msra.mxu0 0.0
    %1063 = vmatprep.subr.mxu0 0.0
    %1064 = vmatpush1.msra.mxu0 0.0
    %1065 = vmatprep.subr.mxu0 0.0
    %1066 = vmatpush1.msra.mxu0 0.0
    %1067 = vmatprep.subr.mxu0 0.0
    %1068 = vmatpush1.msra.mxu0 0.0
    %1069 = vmatprep.subr.mxu0 0.0
    %1070 = vmatpush1.msra.mxu0 0.0
    %1071 = vmatprep.subr.mxu0 0.0
    %1072 = vmatpush1.msra.mxu0 0.0
    %1073 = vmatprep.subr.mxu0 0.0
    %1074 = vmatpush1.msra.mxu0 0.0
    %v1075 = vand.u32 %v888, 4294901760
    %v1076 = vsub.f32 %v888, %v1075
    %v1077 = vand.u32 %v1076, 4294901760
    %v1078 = vsub.f32 %v1076, %v1077
    %v1079 = vand.u32 %v1078, 4294901760
    %1080 = vmatprep.subr.mxu0 %v1079
    %v1081 = vand.u32 %v887, 4294901760
    %v1082 = vsub.f32 %v887, %v1081
    %v1083 = vand.u32 %v1082, 4294901760
    %v1084 = vsub.f32 %v1082, %v1083
    %v1085 = vand.u32 %v1084, 4294901760
    %1086 = vmatpush1.msra.mxu0 %v1085
    %v1087 = vand.u32 %v886, 4294901760
    %v1088 = vsub.f32 %v886, %v1087
    %v1089 = vand.u32 %v1088, 4294901760
    %v1090 = vsub.f32 %v1088, %v1089
    %v1091 = vand.u32 %v1090, 4294901760
    %1092 = vmatprep.subr.mxu0 %v1091
    %v1093 = vand.u32 %v885, 4294901760
    %v1094 = vsub.f32 %v885, %v1093
    %v1095 = vand.u32 %v1094, 4294901760
    %v1096 = vsub.f32 %v1094, %v1095
    %v1097 = vand.u32 %v1096, 4294901760
    %1098 = vmatpush1.msra.mxu0 %v1097
    %1099 = vmatprep.subr.mxu0 0.0
    %1100 = vmatpush2.msra.mxu0 0.0
    %1101 = vmatprep.subr.mxu0 0.0
    %1102 = vmatpush2.msra.mxu0 0.0
    %1103 = vmatprep.subr.mxu0 0.0
    %1104 = vmatpush2.msra.mxu0 0.0
    %1105 = vmatprep.subr.mxu0 0.0
    %1106 = vmatpush2.msra.mxu0 0.0
    %1107 = vmatprep.subr.mxu0 0.0
    %1108 = vmatpush2.msra.mxu0 0.0
    %1109 = vmatprep.subr.mxu0 0.0
    %1110 = vmatpush2.msra.mxu0 0.0
    %1111 = vmatprep.subr.mxu0 0.0
    %1112 = vmatpush2.msra.mxu0 0.0
    %1113 = vmatprep.subr.mxu0 0.0
    %1114 = vmatpush2.msra.mxu0 0.0
    %1115 = vmatprep.subr.mxu0 0.0
    %1116 = vmatpush2.msra.mxu0 0.0
    %1117 = vmatprep.subr.mxu0 0.0
    %1118 = vmatpush2.msra.mxu0 0.0
    %1119 = vmatprep.subr.mxu0 0.0
    %1120 = vmatpush2.msra.mxu0 0.0
    %1121 = vmatprep.subr.mxu0 0.0
    %1122 = vmatpush2.msra.mxu0 0.0
    %1123 = vmatprep.subr.mxu0 0.0
    %1124 = vmatpush2.msra.mxu0 0.0
    %1125 = vmatprep.subr.mxu0 0.0
    %1126 = vmatpush2.msra.mxu0 0.0
    %1127 = vmatprep.subr.mxu0 0.0
    %1128 = vmatpush2.msra.mxu0 0.0
    %1129 = vmatprep.subr.mxu0 0.0
    %1130 = vmatpush2.msra.mxu0 0.0
    %1131 = vmatprep.mubr.f32.mxu0 0.0
    %v1132 = vand.u32 %v951, 4294901760
    %1133 = vmatmul.mubr.f32.gmra.mxu0 %v1132
    %v1134 = vpop.f32.mrf.mxu0
    %v1135 = vadd.f32 %v1032, %v1134
    %v1136 = vpop.f32.mrf.mxu0
    %v1137 = vadd.f32 %v1034, %v1136
    %1138 = vmatprep.mubr.f32.mxu0 0.0
    %v1139 = vand.u32 %v954, 4294901760
    %1140 = vmatmul.mubr.f32.gmra.mxu0 %v1139
    %v1141 = vpop.f32.mrf.mxu0
    %v1142 = vadd.f32 %v1043, %v1141
    %v1143 = vpop.f32.mrf.mxu0
    %v1144 = vadd.f32 %v1045, %v1143
    %1145 = vdwg.mxu0
    %1146 = vmatprep.subr.mxu0 0.0
    %1147 = vmatpush1.msra.mxu0 0.0
    %1148 = vmatprep.subr.mxu0 0.0
    %1149 = vmatpush1.msra.mxu0 0.0
    %1150 = vmatprep.subr.mxu0 0.0
    %1151 = vmatpush1.msra.mxu0 0.0
    %1152 = vmatprep.subr.mxu0 0.0
    %1153 = vmatpush1.msra.mxu0 0.0
    %1154 = vmatprep.subr.mxu0 0.0
    %1155 = vmatpush1.msra.mxu0 0.0
    %1156 = vmatprep.subr.mxu0 0.0
    %1157 = vmatpush1.msra.mxu0 0.0
    %1158 = vmatprep.subr.mxu0 0.0
    %1159 = vmatpush1.msra.mxu0 0.0
    %1160 = vmatprep.subr.mxu0 0.0
    %1161 = vmatpush1.msra.mxu0 0.0
    %1162 = vmatprep.subr.mxu0 0.0
    %1163 = vmatpush1.msra.mxu0 0.0
    %1164 = vmatprep.subr.mxu0 0.0
    %1165 = vmatpush1.msra.mxu0 0.0
    %1166 = vmatprep.subr.mxu0 0.0
    %1167 = vmatpush1.msra.mxu0 0.0
    %1168 = vmatprep.subr.mxu0 0.0
    %1169 = vmatpush1.msra.mxu0 0.0
    %1170 = vmatprep.subr.mxu0 0.0
    %1171 = vmatpush1.msra.mxu0 0.0
    %1172 = vmatprep.subr.mxu0 0.0
    %1173 = vmatpush1.msra.mxu0 0.0
    %v1174 = vand.u32 %v888, 4294901760
    %v1175 = vsub.f32 %v888, %v1174
    %1176 = vmatprep.subr.mxu0 %v1175
    %v1177 = vand.u32 %v887, 4294901760
    %v1178 = vsub.f32 %v887, %v1177
    %1179 = vmatpush1.msra.mxu0 %v1178
    %v1180 = vand.u32 %v886, 4294901760
    %v1181 = vsub.f32 %v886, %v1180
    %1182 = vmatprep.subr.mxu0 %v1181
    %v1183 = vand.u32 %v885, 4294901760
    %v1184 = vsub.f32 %v885, %v1183
    %1185 = vmatpush1.msra.mxu0 %v1184
    %1186 = vmatprep.subr.mxu0 0.0
    %1187 = vmatpush2.msra.mxu0 0.0
    %1188 = vmatprep.subr.mxu0 0.0
    %1189 = vmatpush2.msra.mxu0 0.0
    %1190 = vmatprep.subr.mxu0 0.0
    %1191 = vmatpush2.msra.mxu0 0.0
    %1192 = vmatprep.subr.mxu0 0.0
    %1193 = vmatpush2.msra.mxu0 0.0
    %1194 = vmatprep.subr.mxu0 0.0
    %1195 = vmatpush2.msra.mxu0 0.0
    %1196 = vmatprep.subr.mxu0 0.0
    %1197 = vmatpush2.msra.mxu0 0.0
    %1198 = vmatprep.subr.mxu0 0.0
    %1199 = vmatpush2.msra.mxu0 0.0
    %1200 = vmatprep.subr.mxu0 0.0
    %1201 = vmatpush2.msra.mxu0 0.0
    %1202 = vmatprep.subr.mxu0 0.0
    %1203 = vmatpush2.msra.mxu0 0.0
    %1204 = vmatprep.subr.mxu0 0.0
    %1205 = vmatpush2.msra.mxu0 0.0
    %1206 = vmatprep.subr.mxu0 0.0
    %1207 = vmatpush2.msra.mxu0 0.0
    %1208 = vmatprep.subr.mxu0 0.0
    %1209 = vmatpush2.msra.mxu0 0.0
    %1210 = vmatprep.subr.mxu0 0.0
    %1211 = vmatpush2.msra.mxu0 0.0
    %1212 = vmatprep.subr.mxu0 0.0
    %1213 = vmatpush2.msra.mxu0 0.0
    %1214 = vmatprep.subr.mxu0 0.0
    %1215 = vmatpush2.msra.mxu0 0.0
    %1216 = vmatprep.subr.mxu0 0.0
    %1217 = vmatpush2.msra.mxu0 0.0
    %1218 = vmatprep.mubr.f32.mxu0 0.0
    %v1219 = vand.u32 %v951, 4294901760
    %v1220 = vsub.f32 %v951, %v1219
    %1221 = vmatmul.mubr.f32.gmra.mxu0 %v1220
    %v1222 = vpop.f32.mrf.mxu0
    %v1223 = vadd.f32 %v1135, %v1222
    %v1224 = vpop.f32.mrf.mxu0
    %v1225 = vadd.f32 %v1137, %v1224
    %1226 = vmatprep.mubr.f32.mxu0 0.0
    %v1227 = vand.u32 %v954, 4294901760
    %v1228 = vsub.f32 %v954, %v1227
    %1229 = vmatmul.mubr.f32.gmra.mxu0 %v1228
    %v1230 = vpop.f32.mrf.mxu0
    %v1231 = vadd.f32 %v1142, %v1230
    %v1232 = vpop.f32.mrf.mxu0
    %v1233 = vadd.f32 %v1144, %v1232
    %1234 = vdwg.mxu0
    %1235 = vmatprep.subr.mxu0 0.0
    %1236 = vmatpush1.msra.mxu0 0.0
    %1237 = vmatprep.subr.mxu0 0.0
    %1238 = vmatpush1.msra.mxu0 0.0
    %1239 = vmatprep.subr.mxu0 0.0
    %1240 = vmatpush1.msra.mxu0 0.0
    %1241 = vmatprep.subr.mxu0 0.0
    %1242 = vmatpush1.msra.mxu0 0.0
    %1243 = vmatprep.subr.mxu0 0.0
    %1244 = vmatpush1.msra.mxu0 0.0
    %1245 = vmatprep.subr.mxu0 0.0
    %1246 = vmatpush1.msra.mxu0 0.0
    %1247 = vmatprep.subr.mxu0 0.0
    %1248 = vmatpush1.msra.mxu0 0.0
    %1249 = vmatprep.subr.mxu0 0.0
    %1250 = vmatpush1.msra.mxu0 0.0
    %1251 = vmatprep.subr.mxu0 0.0
    %1252 = vmatpush1.msra.mxu0 0.0
    %1253 = vmatprep.subr.mxu0 0.0
    %1254 = vmatpush1.msra.mxu0 0.0
    %1255 = vmatprep.subr.mxu0 0.0
    %1256 = vmatpush1.msra.mxu0 0.0
    %1257 = vmatprep.subr.mxu0 0.0
    %1258 = vmatpush1.msra.mxu0 0.0
    %1259 = vmatprep.subr.mxu0 0.0
    %1260 = vmatpush1.msra.mxu0 0.0
    %1261 = vmatprep.subr.mxu0 0.0
    %1262 = vmatpush1.msra.mxu0 0.0
    %v1263 = vand.u32 %v888, 4294901760
    %1264 = vmatprep.subr.mxu0 %v1263
    %v1265 = vand.u32 %v887, 4294901760
    %1266 = vmatpush1.msra.mxu0 %v1265
    %v1267 = vand.u32 %v886, 4294901760
    %1268 = vmatprep.subr.mxu0 %v1267
    %v1269 = vand.u32 %v885, 4294901760
    %1270 = vmatpush1.msra.mxu0 %v1269
    %1271 = vmatprep.subr.mxu0 0.0
    %1272 = vmatpush2.msra.mxu0 0.0
    %1273 = vmatprep.subr.mxu0 0.0
    %1274 = vmatpush2.msra.mxu0 0.0
    %1275 = vmatprep.subr.mxu0 0.0
    %1276 = vmatpush2.msra.mxu0 0.0
    %1277 = vmatprep.subr.mxu0 0.0
    %1278 = vmatpush2.msra.mxu0 0.0
    %1279 = vmatprep.subr.mxu0 0.0
    %1280 = vmatpush2.msra.mxu0 0.0
    %1281 = vmatprep.subr.mxu0 0.0
    %1282 = vmatpush2.msra.mxu0 0.0
    %1283 = vmatprep.subr.mxu0 0.0
    %1284 = vmatpush2.msra.mxu0 0.0
    %1285 = vmatprep.subr.mxu0 0.0
    %1286 = vmatpush2.msra.mxu0 0.0
    %1287 = vmatprep.subr.mxu0 0.0
    %1288 = vmatpush2.msra.mxu0 0.0
    %1289 = vmatprep.subr.mxu0 0.0
    %1290 = vmatpush2.msra.mxu0 0.0
    %1291 = vmatprep.subr.mxu0 0.0
    %1292 = vmatpush2.msra.mxu0 0.0
    %1293 = vmatprep.subr.mxu0 0.0
    %1294 = vmatpush2.msra.mxu0 0.0
    %1295 = vmatprep.subr.mxu0 0.0
    %1296 = vmatpush2.msra.mxu0 0.0
    %1297 = vmatprep.subr.mxu0 0.0
    %1298 = vmatpush2.msra.mxu0 0.0
    %1299 = vmatprep.subr.mxu0 0.0
    %1300 = vmatpush2.msra.mxu0 0.0
    %1301 = vmatprep.subr.mxu0 0.0
    %1302 = vmatpush2.msra.mxu0 0.0
    %1303 = vmatprep.mubr.f32.mxu0 0.0
    %v1304 = vand.u32 %v951, 4294901760
    %v1305 = vsub.f32 %v951, %v1304
    %v1306 = vand.u32 %v1305, 4294901760
    %1307 = vmatmul.mubr.f32.gmra.mxu0 %v1306
    %v1308 = vpop.f32.mrf.mxu0
    %v1309 = vadd.f32 %v1223, %v1308
    %v1310 = vpop.f32.mrf.mxu0
    %v1311 = vadd.f32 %v1225, %v1310
    %1312 = vmatprep.mubr.f32.mxu0 0.0
    %v1313 = vand.u32 %v954, 4294901760
    %v1314 = vsub.f32 %v954, %v1313
    %v1315 = vand.u32 %v1314, 4294901760
    %1316 = vmatmul.mubr.f32.gmra.mxu0 %v1315
    %v1317 = vpop.f32.mrf.mxu0
    %v1318 = vadd.f32 %v1231, %v1317
    %v1319 = vpop.f32.mrf.mxu0
    %v1320 = vadd.f32 %v1233, %v1319
    %1321 = vdwg.mxu0
    %1322 = vmatprep.subr.mxu0 0.0
    %1323 = vmatpush1.msra.mxu0 0.0
    %1324 = vmatprep.subr.mxu0 0.0
    %1325 = vmatpush1.msra.mxu0 0.0
    %1326 = vmatprep.subr.mxu0 0.0
    %1327 = vmatpush1.msra.mxu0 0.0
    %1328 = vmatprep.subr.mxu0 0.0
    %1329 = vmatpush1.msra.mxu0 0.0
    %1330 = vmatprep.subr.mxu0 0.0
    %1331 = vmatpush1.msra.mxu0 0.0
    %1332 = vmatprep.subr.mxu0 0.0
    %1333 = vmatpush1.msra.mxu0 0.0
    %1334 = vmatprep.subr.mxu0 0.0
    %1335 = vmatpush1.msra.mxu0 0.0
    %1336 = vmatprep.subr.mxu0 0.0
    %1337 = vmatpush1.msra.mxu0 0.0
    %1338 = vmatprep.subr.mxu0 0.0
    %1339 = vmatpush1.msra.mxu0 0.0
    %1340 = vmatprep.subr.mxu0 0.0
    %1341 = vmatpush1.msra.mxu0 0.0
    %1342 = vmatprep.subr.mxu0 0.0
    %1343 = vmatpush1.msra.mxu0 0.0
    %1344 = vmatprep.subr.mxu0 0.0
    %1345 = vmatpush1.msra.mxu0 0.0
    %1346 = vmatprep.subr.mxu0 0.0
    %1347 = vmatpush1.msra.mxu0 0.0
    %1348 = vmatprep.subr.mxu0 0.0
    %1349 = vmatpush1.msra.mxu0 0.0
    %v1350 = vand.u32 %v888, 4294901760
    %v1351 = vsub.f32 %v888, %v1350
    %v1352 = vand.u32 %v1351, 4294901760
    %1353 = vmatprep.subr.mxu0 %v1352
    %v1354 = vand.u32 %v887, 4294901760
    %v1355 = vsub.f32 %v887, %v1354
    %v1356 = vand.u32 %v1355, 4294901760
    %1357 = vmatpush1.msra.mxu0 %v1356
    %v1358 = vand.u32 %v886, 4294901760
    %v1359 = vsub.f32 %v886, %v1358
    %v1360 = vand.u32 %v1359, 4294901760
    %1361 = vmatprep.subr.mxu0 %v1360
    %v1362 = vand.u32 %v885, 4294901760
    %v1363 = vsub.f32 %v885, %v1362
    %v1364 = vand.u32 %v1363, 4294901760
    %1365 = vmatpush1.msra.mxu0 %v1364
    %1366 = vmatprep.subr.mxu0 0.0
    %1367 = vmatpush2.msra.mxu0 0.0
    %1368 = vmatprep.subr.mxu0 0.0
    %1369 = vmatpush2.msra.mxu0 0.0
    %1370 = vmatprep.subr.mxu0 0.0
    %1371 = vmatpush2.msra.mxu0 0.0
    %1372 = vmatprep.subr.mxu0 0.0
    %1373 = vmatpush2.msra.mxu0 0.0
    %1374 = vmatprep.subr.mxu0 0.0
    %1375 = vmatpush2.msra.mxu0 0.0
    %1376 = vmatprep.subr.mxu0 0.0
    %1377 = vmatpush2.msra.mxu0 0.0
    %1378 = vmatprep.subr.mxu0 0.0
    %1379 = vmatpush2.msra.mxu0 0.0
    %1380 = vmatprep.subr.mxu0 0.0
    %1381 = vmatpush2.msra.mxu0 0.0
    %1382 = vmatprep.subr.mxu0 0.0
    %1383 = vmatpush2.msra.mxu0 0.0
    %1384 = vmatprep.subr.mxu0 0.0
    %1385 = vmatpush2.msra.mxu0 0.0
    %1386 = vmatprep.subr.mxu0 0.0
    %1387 = vmatpush2.msra.mxu0 0.0
    %1388 = vmatprep.subr.mxu0 0.0
    %1389 = vmatpush2.msra.mxu0 0.0
    %1390 = vmatprep.subr.mxu0 0.0
    %1391 = vmatpush2.msra.mxu0 0.0
    %1392 = vmatprep.subr.mxu0 0.0
    %1393 = vmatpush2.msra.mxu0 0.0
    %1394 = vmatprep.subr.mxu0 0.0
    %1395 = vmatpush2.msra.mxu0 0.0
    %1396 = vmatprep.subr.mxu0 0.0
    %1397 = vmatpush2.msra.mxu0 0.0
    %1398 = vmatprep.mubr.f32.mxu0 0.0
    %v1399 = vand.u32 %v951, 4294901760
    %1400 = vmatmul.mubr.f32.gmra.mxu0 %v1399
    %v1401 = vpop.f32.mrf.mxu0
    %v1402 = vadd.f32 %v1309, %v1401
    %v1403 = vpop.f32.mrf.mxu0
    %v1404 = vadd.f32 %v1311, %v1403
    %1405 = vmatprep.mubr.f32.mxu0 0.0
    %v1406 = vand.u32 %v954, 4294901760
    %1407 = vmatmul.mubr.f32.gmra.mxu0 %v1406
    %v1408 = vpop.f32.mrf.mxu0
    %v1409 = vadd.f32 %v1318, %v1408
    %v1410 = vpop.f32.mrf.mxu0
    %v1411 = vadd.f32 %v1320, %v1410
    %1412 = vdwg.mxu0
    %1413 = vmatprep.subr.mxu0 0.0
    %1414 = vmatpush1.msra.mxu0 0.0
    %1415 = vmatprep.subr.mxu0 0.0
    %1416 = vmatpush1.msra.mxu0 0.0
    %1417 = vmatprep.subr.mxu0 0.0
    %1418 = vmatpush1.msra.mxu0 0.0
    %1419 = vmatprep.subr.mxu0 0.0
    %1420 = vmatpush1.msra.mxu0 0.0
    %1421 = vmatprep.subr.mxu0 0.0
    %1422 = vmatpush1.msra.mxu0 0.0
    %1423 = vmatprep.subr.mxu0 0.0
    %1424 = vmatpush1.msra.mxu0 0.0
    %1425 = vmatprep.subr.mxu0 0.0
    %1426 = vmatpush1.msra.mxu0 0.0
    %1427 = vmatprep.subr.mxu0 0.0
    %1428 = vmatpush1.msra.mxu0 0.0
    %1429 = vmatprep.subr.mxu0 0.0
    %1430 = vmatpush1.msra.mxu0 0.0
    %1431 = vmatprep.subr.mxu0 0.0
    %1432 = vmatpush1.msra.mxu0 0.0
    %1433 = vmatprep.subr.mxu0 0.0
    %1434 = vmatpush1.msra.mxu0 0.0
    %1435 = vmatprep.subr.mxu0 0.0
    %1436 = vmatpush1.msra.mxu0 0.0
    %1437 = vmatprep.subr.mxu0 0.0
    %1438 = vmatpush1.msra.mxu0 0.0
    %1439 = vmatprep.subr.mxu0 0.0
    %1440 = vmatpush1.msra.mxu0 0.0
    %v1441 = vand.u32 %v888, 4294901760
    %1442 = vmatprep.subr.mxu0 %v1441
    %v1443 = vand.u32 %v887, 4294901760
    %1444 = vmatpush1.msra.mxu0 %v1443
    %v1445 = vand.u32 %v886, 4294901760
    %1446 = vmatprep.subr.mxu0 %v1445
    %v1447 = vand.u32 %v885, 4294901760
    %1448 = vmatpush1.msra.mxu0 %v1447
    %1449 = vmatprep.subr.mxu0 0.0
    %1450 = vmatpush2.msra.mxu0 0.0
    %1451 = vmatprep.subr.mxu0 0.0
    %1452 = vmatpush2.msra.mxu0 0.0
    %1453 = vmatprep.subr.mxu0 0.0
    %1454 = vmatpush2.msra.mxu0 0.0
    %1455 = vmatprep.subr.mxu0 0.0
    %1456 = vmatpush2.msra.mxu0 0.0
    %1457 = vmatprep.subr.mxu0 0.0
    %1458 = vmatpush2.msra.mxu0 0.0
    %1459 = vmatprep.subr.mxu0 0.0
    %1460 = vmatpush2.msra.mxu0 0.0
    %1461 = vmatprep.subr.mxu0 0.0
    %1462 = vmatpush2.msra.mxu0 0.0
    %1463 = vmatprep.subr.mxu0 0.0
    %1464 = vmatpush2.msra.mxu0 0.0
    %1465 = vmatprep.subr.mxu0 0.0
    %1466 = vmatpush2.msra.mxu0 0.0
    %1467 = vmatprep.subr.mxu0 0.0
    %1468 = vmatpush2.msra.mxu0 0.0
    %1469 = vmatprep.subr.mxu0 0.0
    %1470 = vmatpush2.msra.mxu0 0.0
    %1471 = vmatprep.subr.mxu0 0.0
    %1472 = vmatpush2.msra.mxu0 0.0
    %1473 = vmatprep.subr.mxu0 0.0
    %1474 = vmatpush2.msra.mxu0 0.0
    %1475 = vmatprep.subr.mxu0 0.0
    %1476 = vmatpush2.msra.mxu0 0.0
    %1477 = vmatprep.subr.mxu0 0.0
    %1478 = vmatpush2.msra.mxu0 0.0
    %1479 = vmatprep.subr.mxu0 0.0
    %1480 = vmatpush2.msra.mxu0 0.0
    %1481 = vmatprep.mubr.f32.mxu0 0.0
    %v1482 = vand.u32 %v951, 4294901760
    %1483 = vmatmul.mubr.f32.gmra.mxu0 %v1482
    %v1484 = vpop.f32.mrf.mxu0
    %v1485 = vadd.f32 %v1402, %v1484
    %v1486 = vpop.f32.mrf.mxu0
    %v1487 = vadd.f32 %v1404, %v1486
    %1488 = vmatprep.mubr.f32.mxu0 0.0
    %v1489 = vand.u32 %v954, 4294901760
    %1490 = vmatmul.mubr.f32.gmra.mxu0 %v1489
    %v1491 = vpop.f32.mrf.mxu0
    %v1492 = vadd.f32 %v1409, %v1491
    %v1493 = vpop.f32.mrf.mxu0
    %v1494 = vadd.f32 %v1411, %v1493
    %1495 = vdwg.mxu0
    %v1496 = vmul.f32 %v943, %v1485
    %v1497 = vmul.f32 %v944, %v1487
    %v1498 = vmul.f32 %v945, %v1492
    %v1499 = vmul.f32 %v946, %v1494
    %v1500 = vadd.f32 %v1496, %v1498
    %v1501 = vrot.slane %v1500, 4
    %v1502 = vadd.f32 %v1500, %v1501
    %v1503 = vrot.slane %v1502, 2
    %v1504 = vadd.f32 %v1502, %v1503
    %v1505 = vrot.slane %v1504, 1
    %v1506 = vadd.f32 %v1504, %v1505
    %v1507 = vadd.f32 %v1497, %v1499
    %v1508 = vrot.slane %v1507, 4
    %v1509 = vadd.f32 %v1507, %v1508
    %v1510 = vrot.slane %v1509, 2
    %v1511 = vadd.f32 %v1509, %v1510
    %v1512 = vrot.slane %v1511, 1
    %v1513 = vadd.f32 %v1511, %v1512
    %v1516 = vcombine.low %v1506, %v1513
    %v1518 = vunpack.c.l.s4 1966171168
    %v1519 = vunpack.c.0.s8 %v1518
    %v1520 = vlaneseq
    %v1521 = vshrl.u32 %v1520, 7
    %v1522 = vsub.s32 %v1519, %v1521
    %v1523 = vrot.slane %v1516, %v1522
    %v1525 = vunpack.c.l.s4 1966171168
    %v1526 = vunpack.c.0.s8 %v1525
    %v1527 = vlaneseq
    %v1528 = vshrl.u32 %v1527, 7
    %v1529 = vsub.s32 %v1526, %v1528
    %v1530 = vrot.slane %v1523, %v1529
    %s1532 = scalar_lea.vmem [#allocation8], 2
    %1533 = vst.msk [vmem:[%s1532] sm:$0x3] %vm796, %v1530
    // Predicated region
    $region26: #{tpu_custom_call.1} parent=1 // pred_check
      _
    $region27: #{tpu_custom_call.1} parent=1 // pred_check_branch
      %1535 = sbr.rel (0) target = $region29
    $region28: #{tpu_custom_call.1} parent=1 // pred_region
      %s1537 = ssub.s32 64, 64
      %1538 = vsyncadd [#allocation4], %s1537
      %s1539 = sshll.u32 [#allocation8], 4
      %s1540 = int_to_ptr.vmem [resolvable:$true] %s1539
      %1545 = dma.vmem_to_hbm [thread:$0]  %s1540, 64, %s3, [#allocation4], 32, 32, 2
    $region29: #{tpu_custom_call.1} parent=1 // pred_fallthru
      _
    // Predicated region
    $region30: #{tpu_custom_call.1} parent=1 // pred_check
      _
    $region31: #{tpu_custom_call.1} parent=1 // pred_check_branch
      %1547 = sbr.rel (0) target = $region33
    $region32: #{tpu_custom_call.1} parent=1 // pred_region
      %1548 = dma.done [#allocation4], 64
    $region33: #{tpu_custom_call.1} parent=1 // pred_fallthru
      _
    %1549 = vsyncpa [#allocation3], 1
    %1550 = vsyncpa [#allocation6], 1
    %1551 = vsyncpa [#allocation4], 1

</llo_original>
